<compile_context>
chip_gen: v6e
topology: v6e:2x2x1
jax: 0.10.0
libtpu: 0.0.40
codegen_flags: <defaults>
</compile_context>

<pallas_src>
import jax
import jax.numpy as jnp
from jax.experimental import pallas as pl
from jax.experimental.pallas import tpu as pltpu


# ---------------------------------------------------------------------------
# Kernel
# ---------------------------------------------------------------------------
def basic_block_kernel(xm_ref, xh_ref, w1_ref, b1_ref, w2_ref, b2_ref, o_ref):
    """One (batch, row-tile) grid step.

    xm_ref : (1, R, W, Cp) bf16  padded-x rows [r*R, r*R+R)     (= x rows r*R-2 .. r*R+R-3)
    xh_ref : (1, 4, W, Cp) bf16  padded-x rows [r*R+R, r*R+R+4) (= x rows r*R+R-2 .. r*R+R+1)
    w1_ref : (9*Cp, Cp)    bf16  conv1 weights, K packed as (kh, kw, cin), BN1 scale folded
    w2_ref : (9*Cp, Cp)    bf16  conv2 weights, BN2 scale folded
    b1_ref, b2_ref : (1, Cp) f32 folded BN biases
    o_ref  : (1, R, W, Cp) f32   output rows [r*R, r*R+R)
    """
    _, R, W, Cp = o_ref.shape
    r = pl.program_id(1)
    last = pl.num_programs(1) - 1
    rows1 = R + 2                                    # conv1 output rows (1-row halo each side)

    # (R+4)-row input window; image-border rows are already zero because x was
    # padded by 2 rows (top & bottom) once in HBM.
    xw_rows = jnp.concatenate([xm_ref[0], xh_ref[0]], axis=0)         # (R+4, W, Cp) bf16
    zc_in = jnp.zeros((R + 4, 1, Cp), jnp.bfloat16)
    xw = jnp.concatenate([zc_in, xw_rows, zc_in], axis=1)             # (R+4, W+2, Cp)

    # ---- conv1: single K-packed (im2col) MXU matmul, K = 9*Cp ----
    p1 = jnp.concatenate(
        [xw[kh:kh + rows1, kw:kw + W, :] for kh in range(3) for kw in range(3)],
        axis=-1).reshape(rows1 * W, 9 * Cp)
    acc1 = jnp.dot(p1, w1_ref[...], preferred_element_type=jnp.float32)
    mid = jnp.maximum(acc1 + b1_ref[...], 0.0).reshape(rows1, W, Cp)  # bn1 bias + relu

    # mid rows outside the image must be zero (they act as conv2's zero padding)
    t_idx = jax.lax.broadcasted_iota(jnp.int32, (rows1, 1, 1), 0)
    keep = jnp.logical_and(jnp.logical_or(t_idx > 0, r != 0),
                           jnp.logical_or(t_idx < rows1 - 1, r != last))
    mid = jnp.where(keep, mid, 0.0).astype(jnp.bfloat16)

    # ---- conv2: second K-packed matmul ----
    zc_mid = jnp.zeros((rows1, 1, Cp), jnp.bfloat16)
    midp = jnp.concatenate([zc_mid, mid, zc_mid], axis=1)             # (R+2, W+2, Cp)
    p2 = jnp.concatenate(
        [midp[kh:kh + R, kw:kw + W, :] for kh in range(3) for kw in range(3)],
        axis=-1).reshape(R * W, 9 * Cp)
    acc2 = jnp.dot(p2, w2_ref[...], preferred_element_type=jnp.float32)

    # ---- bn2 bias + identity residual + relu (f32 epilogue) ----
    res = xw_rows[2:R + 2].astype(jnp.float32).reshape(R * W, Cp)
    out = jnp.maximum(acc2 + b2_ref[...] + res, 0.0)
    o_ref[...] = out.reshape(1, R, W, Cp)


# ---------------------------------------------------------------------------
# Wrapper helpers
# ---------------------------------------------------------------------------
def fold_bn(gamma, beta, mean, var, eps=1e-5):
    scale = gamma / jnp.sqrt(var + eps)
    bias = beta - mean * scale
    return scale, bias


def _vmem_capacity_bytes():
    try:
        return int(pltpu.get_tpu_info().vmem_capacity_bytes)
    except Exception:
        return 64 * 1024 * 1024          # conservative (v7x) fallback


def _tile_vmem_bytes(R, W, Cp):
    """Per-grid-step VMEM working set (bytes): pipeline double buffers, weights
    (assumed double-buffered), im2col patch buffers and f32 temporaries."""
    f32, bf16 = 4, 2
    din = 2 * (R + 4) * W * Cp * bf16                     # double-buffered x window (main+halo)
    dout = 2 * R * W * Cp * f32                           # double-buffered output
    wts = 2 * 2 * 9 * Cp * Cp * bf16 + 2 * 2 * Cp * f32   # w1, w2 (x2 buffers) + biases
    xwin = (R + 4) * (W + 2) * Cp * bf16                  # column-padded window value
    patches = ((R + 2) + R) * W * 9 * Cp * bf16           # im2col buffers (conv1 + conv2)
    temps = (R + 2) * W * Cp * (f32 + bf16) + 2 * R * W * Cp * f32
    return din + dout + wts + xwin + patches + temps


def _pick_tile_rows(H, W, Cp):
    """Largest row tile (multiple of 4 dividing H) whose working set fits the
    per-generation VMEM budget, preferring >= 2 tiles per image so both v7x
    TensorCores receive independent 'parallel' grid steps."""
    cap = _vmem_capacity_bytes()
    budget = cap // 3 if cap >= 96 * 1024 * 1024 else cap // 4
    cands = [d for d in range(4, H + 1, 4) if H % d == 0]
    pref = [d for d in cands if H // d >= 2] or cands
    best = pref[0]
    for d in pref:
        if _tile_vmem_bytes(d, W, Cp) <= budget:
            best = d
    return best


# ---------------------------------------------------------------------------
# Forward wrapper
# ---------------------------------------------------------------------------
def basic_block_forward(x_nchw, params, tile_rows=None):
    """x_nchw: (N, Cin, H, W) float32. Returns (N, C, H, W) float32."""
    (w1, g1, be1, m1, v1, w2, g2, be2, m2, v2) = params
    s1, b1 = fold_bn(g1, be1, m1, v1)
    s2, b2 = fold_bn(g2, be2, m2, v2)

    x = jnp.transpose(x_nchw, (0, 2, 3, 1))                 # NHWC
    N, H, W, Cin = x.shape
    C = w1.shape[-1]
    assert Cin == C, "identity residual path requires inplanes == planes"
    assert H % 4 == 0, "row tiling requires H % 4 == 0"

    # lane-dense channel padding (C maps to the 128-wide lane axis)
    Cp = ((max(C, 1) + 127) // 128) * 128
    pc = Cp - C

    # fold BN scales into the conv weights, pad channels, pack K = (kh, kw, cin)
    w1f = w1 * s1                                           # (3,3,Cin,C), scale over Cout
    w2f = w2 * s2
    if pc:
        w1f = jnp.pad(w1f, ((0, 0), (0, 0), (0, pc), (0, pc)))
        w2f = jnp.pad(w2f, ((0, 0), (0, 0), (0, pc), (0, pc)))
        b1 = jnp.pad(b1, (0, pc))
        b2 = jnp.pad(b2, (0, pc))
    w1p = w1f.reshape(9 * Cp, Cp).astype(jnp.bfloat16)
    w2p = w2f.reshape(9 * Cp, Cp).astype(jnp.bfloat16)
    b1 = b1.reshape(1, Cp).astype(jnp.float32)
    b2 = b2.reshape(1, Cp).astype(jnp.float32)

    # bf16 input DMA; pad 2 halo rows top/bottom ONCE in HBM (no per-tile halo array)
    xp = jnp.pad(x.astype(jnp.bfloat16), ((0, 0), (2, 2), (0, 0), (0, pc)))  # (N, H+4, W, Cp)

    R = _pick_tile_rows(H, W, Cp) if tile_rows is None else int(tile_rows)
    assert R % 4 == 0 and H % R == 0, "tile_rows must divide H and be a multiple of 4"
    HT = H // R
    vmem_limit = _vmem_capacity_bytes() // 2

    flops = 2 * 2 * 9 * N * H * W * Cp * Cp                 # 2 convs, 2 flops per MAC
    bytes_accessed = (xp.size * 2 + N * H * W * Cp * 4
                      + (w1p.size + w2p.size) * 2 + (b1.size + b2.size) * 4)

    out_nhwc = pl.pallas_call(
        basic_block_kernel,
        out_shape=jax.ShapeDtypeStruct((N, H, W, Cp), jnp.float32),
        grid=(N, HT),
        in_specs=[
            # main R rows of the padded input (bf16)
            pl.BlockSpec((1, R, W, Cp), lambda n, r: (n, r, 0, 0)),
            # 4-row bottom halo read from the SAME padded array (4-row blocks)
            pl.BlockSpec((1, 4, W, Cp), lambda n, r: (n, (r + 1) * (R // 4), 0, 0)),
            pl.BlockSpec((9 * Cp, Cp), lambda n, r: (0, 0)),
            pl.BlockSpec((1, Cp), lambda n, r: (0, 0)),
            pl.BlockSpec((9 * Cp, Cp), lambda n, r: (0, 0)),
            pl.BlockSpec((1, Cp), lambda n, r: (0, 0)),
        ],
        out_specs=pl.BlockSpec((1, R, W, Cp), lambda n, r: (n, r, 0, 0)),
        compiler_params=pltpu.CompilerParams(
            dimension_semantics=("parallel", "parallel"),
            vmem_limit_bytes=int(vmem_limit)),
        cost_estimate=pl.CostEstimate(flops=flops, transcendentals=0,
                                      bytes_accessed=int(bytes_accessed)),
    )(xp, xp, w1p, b1, w2p, b2)

    out = out_nhwc[..., :C]                                 # drop lane padding
    return jnp.transpose(out, (0, 3, 1, 2))                 # back to NCHW


# ---------------------------------------------------------------------------
# Plain-JAX reference (eval-mode BN), for correctness checking
# ---------------------------------------------------------------------------
def basic_block_reference(x_nchw, params):
    (w1, g1, be1, m1, v1, w2, g2, be2, m2, v2) = params
    s1, b1 = fold_bn(g1, be1, m1, v1)
    s2, b2 = fold_bn(g2, be2, m2, v2)
    x = jnp.transpose(x_nchw, (0, 2, 3, 1))
    dn = jax.lax.conv_dimension_numbers(x.shape, w1.shape,
                                        ("NHWC", "HWIO", "NHWC"))
    o = jax.lax.conv_general_dilated(x, w1, (1, 1), ((1, 1), (1, 1)),
                                     dimension_numbers=dn)
    o = jnp.maximum(o * s1 + b1, 0.0)
    o = jax.lax.conv_general_dilated(o, w2, (1, 1), ((1, 1), (1, 1)),
                                     dimension_numbers=dn)
    o = o * s2 + b2
    o = jnp.maximum(o + x, 0.0)
    return jnp.transpose(o, (0, 3, 1, 2))


if __name__ == "__main__":
    # Small shapes: inplanes = planes = 4 (downsample=None requires equal channels).
    N, C, H, W = 2, 4, 16, 16

    key = jax.random.PRNGKey(0)
    ks = jax.random.split(key, 8)
    x = jax.random.normal(ks[0], (N, C, H, W), jnp.float32)

    # Deterministic parameters (conv weights in HWIO; BN params per-channel).
    w1 = jax.random.normal(ks[1], (3, 3, C, C), jnp.float32) * 0.1
    w2 = jax.random.normal(ks[2], (3, 3, C, C), jnp.float32) * 0.1
    g1 = 1.0 + 0.1 * jax.random.normal(ks[3], (C,), jnp.float32)
    be1 = 0.1 * jax.random.normal(ks[4], (C,), jnp.float32)
    m1 = 0.05 * jax.random.normal(ks[5], (C,), jnp.float32)
    v1 = 1.0 + 0.1 * jnp.abs(jax.random.normal(ks[6], (C,), jnp.float32))
    g2 = jnp.ones((C,), jnp.float32)
    be2 = jnp.zeros((C,), jnp.float32)
    m2 = jnp.zeros((C,), jnp.float32)
    v2 = jnp.ones((C,), jnp.float32) + 0.1 * jnp.abs(
        jax.random.normal(ks[7], (C,), jnp.float32))

    params = (w1, g1, be1, m1, v1, w2, g2, be2, m2, v2)
    ref = basic_block_reference(x, params)

    # Explicit multi-tile path (4 row tiles/image) and auto tile selection (2 tiles).
    out_tiled = jax.block_until_ready(basic_block_forward(x, params, tile_rows=4))
    out_auto = jax.block_until_ready(basic_block_forward(x, params))

    assert out_tiled.shape == (N, C, H, W)
    # bf16 MXU operands / bf16 input DMA with f32 accumulation -> loosened tolerance.
    assert jnp.allclose(out_tiled, ref, atol=5e-2, rtol=5e-2), "tiled mismatch"
    assert jnp.allclose(out_auto, ref, atol=5e-2, rtol=5e-2), "auto-tile mismatch"

    print("KERNEL_OK")
</pallas_src>

<mosaic_0001>
module attributes {stable_mosaic.version = 11 : i64} {
  func.func @basic_block_kernel(%arg0: i32, %arg1: i32, %arg2: memref<1x4x16x128xbf16, #tpu.memory_space<vmem>>, %arg3: memref<1x4x16x128xbf16, #tpu.memory_space<vmem>>, %arg4: memref<1152x128xbf16, #tpu.memory_space<vmem>>, %arg5: memref<1x128xf32, #tpu.memory_space<vmem>>, %arg6: memref<1152x128xbf16, #tpu.memory_space<vmem>>, %arg7: memref<1x128xf32, #tpu.memory_space<vmem>>, %arg8: memref<1x4x16x128xf32, #tpu.memory_space<vmem>>) attributes {dimension_semantics = [#tpu.dimension_semantics<parallel>, #tpu.dimension_semantics<parallel>], iteration_bounds = array<i64: 2, 4>, scalar_prefetch = 0 : i64, scratch_operands = 0 : i64, tpu.core_type = #tpu.core_type<tc>, window_params = [{transform_indices = @transform_0, window_bounds = array<i64: 1, 4, 16, 128>}, {transform_indices = @transform_1, window_bounds = array<i64: 1, 4, 16, 128>}, {pipeline_mode = #tpu.pipeline_mode<synchronous>, transform_indices = @transform_2, window_bounds = array<i64: 1152, 128>}, {pipeline_mode = #tpu.pipeline_mode<synchronous>, transform_indices = @transform_3, window_bounds = array<i64: 1, 128>}, {pipeline_mode = #tpu.pipeline_mode<synchronous>, transform_indices = @transform_4, window_bounds = array<i64: 1152, 128>}, {pipeline_mode = #tpu.pipeline_mode<synchronous>, transform_indices = @transform_5, window_bounds = array<i64: 1, 128>}, {transform_indices = @transform_6, window_bounds = array<i64: 1, 4, 16, 128>}]} {
    %c0 = arith.constant 0 : index
    %c0_0 = arith.constant 0 : index
    %c0_1 = arith.constant 0 : index
    %c0_2 = arith.constant 0 : index
    %0 = vector.load %arg2[%c0, %c0_0, %c0_1, %c0_2] : memref<1x4x16x128xbf16, #tpu.memory_space<vmem>>, vector<1x4x16x128xbf16>
    %1 = vector.shape_cast %0 : vector<1x4x16x128xbf16> to vector<4x16x128xbf16>
    %c0_3 = arith.constant 0 : index
    %c0_4 = arith.constant 0 : index
    %c0_5 = arith.constant 0 : index
    %c0_6 = arith.constant 0 : index
    %2 = vector.load %arg3[%c0_3, %c0_4, %c0_5, %c0_6] : memref<1x4x16x128xbf16, #tpu.memory_space<vmem>>, vector<1x4x16x128xbf16>
    %3 = vector.shape_cast %2 : vector<1x4x16x128xbf16> to vector<4x16x128xbf16>
    %4 = tpu.concatenate %1, %3 in 0 : vector<4x16x128xbf16>, vector<4x16x128xbf16> -> vector<8x16x128xbf16>
    %cst = arith.constant 0.000000e+00 : bf16
    %5 = vector.broadcast %cst : bf16 to vector<8x1x128xbf16>
    %6 = tpu.concatenate %5, %4, %5 in 1 : vector<8x1x128xbf16>, vector<8x16x128xbf16>, vector<8x1x128xbf16> -> vector<8x18x128xbf16>
    %7 = vector.extract_strided_slice %6 {offsets = [0, 0, 0], sizes = [6, 16, 128], strides = [1, 1, 1]} : vector<8x18x128xbf16> to vector<6x16x128xbf16>
    %8 = vector.extract_strided_slice %6 {offsets = [0, 1, 0], sizes = [6, 16, 128], strides = [1, 1, 1]} : vector<8x18x128xbf16> to vector<6x16x128xbf16>
    %9 = vector.extract_strided_slice %6 {offsets = [0, 2, 0], sizes = [6, 16, 128], strides = [1, 1, 1]} : vector<8x18x128xbf16> to vector<6x16x128xbf16>
    %10 = vector.extract_strided_slice %6 {offsets = [1, 0, 0], sizes = [6, 16, 128], strides = [1, 1, 1]} : vector<8x18x128xbf16> to vector<6x16x128xbf16>
    %11 = vector.extract_strided_slice %6 {offsets = [1, 1, 0], sizes = [6, 16, 128], strides = [1, 1, 1]} : vector<8x18x128xbf16> to vector<6x16x128xbf16>
    %12 = vector.extract_strided_slice %6 {offsets = [1, 2, 0], sizes = [6, 16, 128], strides = [1, 1, 1]} : vector<8x18x128xbf16> to vector<6x16x128xbf16>
    %13 = vector.extract_strided_slice %6 {offsets = [2, 0, 0], sizes = [6, 16, 128], strides = [1, 1, 1]} : vector<8x18x128xbf16> to vector<6x16x128xbf16>
    %14 = vector.extract_strided_slice %6 {offsets = [2, 1, 0], sizes = [6, 16, 128], strides = [1, 1, 1]} : vector<8x18x128xbf16> to vector<6x16x128xbf16>
    %15 = vector.extract_strided_slice %6 {offsets = [2, 2, 0], sizes = [6, 16, 128], strides = [1, 1, 1]} : vector<8x18x128xbf16> to vector<6x16x128xbf16>
    %16 = tpu.concatenate %7, %8, %9, %10, %11, %12, %13, %14, %15 in 2 : vector<6x16x128xbf16>, vector<6x16x128xbf16>, vector<6x16x128xbf16>, vector<6x16x128xbf16>, vector<6x16x128xbf16>, vector<6x16x128xbf16>, vector<6x16x128xbf16>, vector<6x16x128xbf16>, vector<6x16x128xbf16> -> vector<6x16x1152xbf16>
    %17 = vector.shape_cast %16 : vector<6x16x1152xbf16> to vector<96x1152xbf16>
    %c0_7 = arith.constant 0 : index
    %c0_8 = arith.constant 0 : index
    %18 = vector.load %arg4[%c0_7, %c0_8] : memref<1152x128xbf16, #tpu.memory_space<vmem>>, vector<1152x128xbf16>
    %cst_9 = arith.constant dense<0.000000e+00> : vector<96x128xf32>
    %19 = tpu.matmul %17, %18, %cst_9 {dimension_numbers = #tpu.dot_dimension_numbers<[1], [0], [0], [1], [0, 0, 1, 1], [], []>} : vector<96x1152xbf16>, vector<1152x128xbf16>, vector<96x128xf32> -> vector<96x128xf32>
    %c0_10 = arith.constant 0 : index
    %c0_11 = arith.constant 0 : index
    %20 = vector.load %arg5[%c0_10, %c0_11] : memref<1x128xf32, #tpu.memory_space<vmem>>, vector<1x128xf32>
    %21 = vector.broadcast %20 : vector<1x128xf32> to vector<96x128xf32>
    %22 = arith.addf %19, %21 : vector<96x128xf32>
    %cst_12 = arith.constant 0.000000e+00 : f32
    %23 = vector.broadcast %cst_12 : f32 to vector<96x128xf32>
    %24 = arith.maximumf %22, %23 : vector<96x128xf32>
    %25 = vector.shape_cast %24 : vector<96x128xf32> to vector<6x16x128xf32>
    %26 = tpu.iota {dimensions = array<i32: 0>} : vector<6x1x1xi32>
    %c0_i32 = arith.constant 0 : i32
    %27 = vector.broadcast %c0_i32 : i32 to vector<6x1x1xi32>
    %28 = arith.cmpi sgt, %26, %27 : vector<6x1x1xi32>
    %c0_i32_13 = arith.constant 0 : i32
    %29 = arith.cmpi ne, %arg1, %c0_i32_13 : i32
    %30 = vector.broadcast %29 : i1 to vector<6x1x1xi1>
    %31 = arith.ori %28, %30 : vector<6x1x1xi1>
    %c5_i32 = arith.constant 5 : i32
    %32 = vector.broadcast %c5_i32 : i32 to vector<6x1x1xi32>
    %33 = arith.cmpi slt, %26, %32 : vector<6x1x1xi32>
    %c3_i32 = arith.constant 3 : i32
    %34 = arith.cmpi ne, %arg1, %c3_i32 : i32
    %35 = vector.broadcast %34 : i1 to vector<6x1x1xi1>
    %36 = arith.ori %33, %35 : vector<6x1x1xi1>
    %37 = arith.andi %31, %36 : vector<6x1x1xi1>
    %cst_14 = arith.constant 0.000000e+00 : f32
    %38 = vector.shape_cast %37 : vector<6x1x1xi1> to vector<6x1x1xi1>
    %39 = vector.broadcast %38 : vector<6x1x1xi1> to vector<6x16x128xi1>
    %40 = vector.broadcast %cst_14 : f32 to vector<6x16x128xf32>
    %41 = arith.select %39, %25, %40 : vector<6x16x128xi1>, vector<6x16x128xf32>
    %42 = arith.truncf %41 : vector<6x16x128xf32> to vector<6x16x128xbf16>
    %cst_15 = arith.constant 0.000000e+00 : bf16
    %43 = vector.broadcast %cst_15 : bf16 to vector<6x1x128xbf16>
    %44 = tpu.concatenate %43, %42, %43 in 1 : vector<6x1x128xbf16>, vector<6x16x128xbf16>, vector<6x1x128xbf16> -> vector<6x18x128xbf16>
    %45 = vector.extract_strided_slice %44 {offsets = [0, 0, 0], sizes = [4, 16, 128], strides = [1, 1, 1]} : vector<6x18x128xbf16> to vector<4x16x128xbf16>
    %46 = vector.extract_strided_slice %44 {offsets = [0, 1, 0], sizes = [4, 16, 128], strides = [1, 1, 1]} : vector<6x18x128xbf16> to vector<4x16x128xbf16>
    %47 = vector.extract_strided_slice %44 {offsets = [0, 2, 0], sizes = [4, 16, 128], strides = [1, 1, 1]} : vector<6x18x128xbf16> to vector<4x16x128xbf16>
    %48 = vector.extract_strided_slice %44 {offsets = [1, 0, 0], sizes = [4, 16, 128], strides = [1, 1, 1]} : vector<6x18x128xbf16> to vector<4x16x128xbf16>
    %49 = vector.extract_strided_slice %44 {offsets = [1, 1, 0], sizes = [4, 16, 128], strides = [1, 1, 1]} : vector<6x18x128xbf16> to vector<4x16x128xbf16>
    %50 = vector.extract_strided_slice %44 {offsets = [1, 2, 0], sizes = [4, 16, 128], strides = [1, 1, 1]} : vector<6x18x128xbf16> to vector<4x16x128xbf16>
    %51 = vector.extract_strided_slice %44 {offsets = [2, 0, 0], sizes = [4, 16, 128], strides = [1, 1, 1]} : vector<6x18x128xbf16> to vector<4x16x128xbf16>
    %52 = vector.extract_strided_slice %44 {offsets = [2, 1, 0], sizes = [4, 16, 128], strides = [1, 1, 1]} : vector<6x18x128xbf16> to vector<4x16x128xbf16>
    %53 = vector.extract_strided_slice %44 {offsets = [2, 2, 0], sizes = [4, 16, 128], strides = [1, 1, 1]} : vector<6x18x128xbf16> to vector<4x16x128xbf16>
    %54 = tpu.concatenate %45, %46, %47, %48, %49, %50, %51, %52, %53 in 2 : vector<4x16x128xbf16>, vector<4x16x128xbf16>, vector<4x16x128xbf16>, vector<4x16x128xbf16>, vector<4x16x128xbf16>, vector<4x16x128xbf16>, vector<4x16x128xbf16>, vector<4x16x128xbf16>, vector<4x16x128xbf16> -> vector<4x16x1152xbf16>
    %55 = vector.shape_cast %54 : vector<4x16x1152xbf16> to vector<64x1152xbf16>
    %c0_16 = arith.constant 0 : index
    %c0_17 = arith.constant 0 : index
    %56 = vector.load %arg6[%c0_16, %c0_17] : memref<1152x128xbf16, #tpu.memory_space<vmem>>, vector<1152x128xbf16>
    %cst_18 = arith.constant dense<0.000000e+00> : vector<64x128xf32>
    %57 = tpu.matmul %55, %56, %cst_18 {dimension_numbers = #tpu.dot_dimension_numbers<[1], [0], [0], [1], [0, 0, 1, 1], [], []>} : vector<64x1152xbf16>, vector<1152x128xbf16>, vector<64x128xf32> -> vector<64x128xf32>
    %58 = vector.extract_strided_slice %4 {offsets = [2, 0, 0], sizes = [4, 16, 128], strides = [1, 1, 1]} : vector<8x16x128xbf16> to vector<4x16x128xbf16>
    %59 = arith.extf %58 : vector<4x16x128xbf16> to vector<4x16x128xf32>
    %60 = vector.shape_cast %59 : vector<4x16x128xf32> to vector<64x128xf32>
    %c0_19 = arith.constant 0 : index
    %c0_20 = arith.constant 0 : index
    %61 = vector.load %arg7[%c0_19, %c0_20] : memref<1x128xf32, #tpu.memory_space<vmem>>, vector<1x128xf32>
    %62 = vector.broadcast %61 : vector<1x128xf32> to vector<64x128xf32>
    %63 = arith.addf %57, %62 : vector<64x128xf32>
    %64 = arith.addf %63, %60 : vector<64x128xf32>
    %cst_21 = arith.constant 0.000000e+00 : f32
    %65 = vector.broadcast %cst_21 : f32 to vector<64x128xf32>
    %66 = arith.maximumf %64, %65 : vector<64x128xf32>
    %67 = vector.shape_cast %66 : vector<64x128xf32> to vector<1x4x16x128xf32>
    %c0_22 = arith.constant 0 : index
    %c0_23 = arith.constant 0 : index
    %c0_24 = arith.constant 0 : index
    %c0_25 = arith.constant 0 : index
    %68 = vector.load %arg8[%c0_22, %c0_23, %c0_24, %c0_25] : memref<1x4x16x128xf32, #tpu.memory_space<vmem>>, vector<1x4x16x128xf32>
    tpu.vector_store %arg8[%c0_22, %c0_23, %c0_24, %c0_25], %67 {strides = array<i32>} : memref<1x4x16x128xf32, #tpu.memory_space<vmem>>, vector<1x4x16x128xf32>,
    return
  }
  func.func @transform_0(%arg0: i32, %arg1: i32) -> (i32, i32, i32, i32) {
    %c0_i32 = arith.constant 0 : i32
    %c0_i32_0 = arith.constant 0 : i32
    %c0_i32_1 = arith.constant 0 : i32
    return %arg0, %arg1, %c0_i32, %c0_i32_0 : i32, i32, i32, i32
  }
  func.func @transform_1(%arg0: i32, %arg1: i32) -> (i32, i32, i32, i32) {
    %c1_i32 = arith.constant 1 : i32
    %0 = arith.addi %arg1, %c1_i32 : i32
    %c1_i32_0 = arith.constant 1 : i32
    %1 = arith.muli %0, %c1_i32_0 : i32
    %c0_i32 = arith.constant 0 : i32
    %c0_i32_1 = arith.constant 0 : i32
    %c0_i32_2 = arith.constant 0 : i32
    return %arg0, %1, %c0_i32, %c0_i32_1 : i32, i32, i32, i32
  }
  func.func @transform_2(%arg0: i32, %arg1: i32) -> (i32, i32) {
    %c0_i32 = arith.constant 0 : i32
    %c0_i32_0 = arith.constant 0 : i32
    %c0_i32_1 = arith.constant 0 : i32
    return %c0_i32, %c0_i32_0 : i32, i32
  }
  func.func @transform_3(%arg0: i32, %arg1: i32) -> (i32, i32) {
    %c0_i32 = arith.constant 0 : i32
    %c0_i32_0 = arith.constant 0 : i32
    %c0_i32_1 = arith.constant 0 : i32
    return %c0_i32, %c0_i32_0 : i32, i32
  }
  func.func @transform_4(%arg0: i32, %arg1: i32) -> (i32, i32) {
    %c0_i32 = arith.constant 0 : i32
    %c0_i32_0 = arith.constant 0 : i32
    %c0_i32_1 = arith.constant 0 : i32
    return %c0_i32, %c0_i32_0 : i32, i32
  }
  func.func @transform_5(%arg0: i32, %arg1: i32) -> (i32, i32) {
    %c0_i32 = arith.constant 0 : i32
    %c0_i32_0 = arith.constant 0 : i32
    %c0_i32_1 = arith.constant 0 : i32
    return %c0_i32, %c0_i32_0 : i32, i32
  }
  func.func @transform_6(%arg0: i32, %arg1: i32) -> (i32, i32, i32, i32) {
    %c0_i32 = arith.constant 0 : i32
    %c0_i32_0 = arith.constant 0 : i32
    %c0_i32_1 = arith.constant 0 : i32
    return %arg0, %arg1, %c0_i32, %c0_i32_0 : i32, i32, i32, i32
  }
}

</mosaic_0001>

<llo_original>
// kernel: tpu_custom_call.1
$region0: #{tpu_custom_call.1}
  #allocation0 [shape = 'u32[]', space=smem, size = 0x4, offset = 0x4, fixed_abs, tag = 'smem constant byte address 0x4 - core index']
  #allocation1 [shape = 'u32[144,128]{1,0:T(1,128)}', space=vmem, size = 0x12000, scoped, tag = 'internal scratch']
  %s0 = inlined_call_operand.hbm [shape: bf16[2,20,16,128], index: 0, kind: input, shape index: {}]
  %s1 = inlined_call_operand.hbm [shape: bf16[2,20,16,128], index: 1, kind: input, shape index: {}]
  %s2 = inlined_call_operand.hbm [shape: bf16[1152,128], index: 2, kind: input, shape index: {}]
  %s3 = inlined_call_operand.vmem [shape: f32[1,128], index: 3, kind: input, shape index: {}]
  %s4 = inlined_call_operand.hbm [shape: bf16[1152,128], index: 4, kind: input, shape index: {}]
  %s5 = inlined_call_operand.vmem [shape: f32[1,128], index: 5, kind: input, shape index: {}]
  %s6 = inlined_call_operand.hbm [shape: f32[2,16,16,128], index: 6, kind: output, shape index: {}]
  %s7 = sld [smem:[#allocation0]]
  $region73: #{tpu_custom_call.1} parent=0
    _
  %s9 = ssub.s32 1, %s7
  %s10 = scalar_select 0, %s9, %s7
  $region1: #{tpu_custom_call.1} parent=0
    #allocation2 [shape = 'u8[32768]{0}', space=vmem, size = 0x8000, scoped, tag = 'input window, operand 0']
    #allocation3 [shape = 's32[2]{0}', space=sflag, size = 0x8, scoped, tag = 'scoped memory for tpu_custom_call.1']
    #allocation4 [shape = 's32[2]{0}', space=sflag, size = 0x8, scoped, tag = 'scoped memory for tpu_custom_call.1']
    #allocation5 [shape = 'u8[32768]{0}', space=vmem, size = 0x8000, scoped, tag = 'input window, operand 1']
    #allocation6 [shape = 's32[2]{0}', space=sflag, size = 0x8, scoped, tag = 'scoped memory for tpu_custom_call.1']
    #allocation7 [shape = 'u8[294912]{0}', space=vmem, size = 0x48000, scoped, tag = 'input window, operand 2, single buffered']
    #allocation8 [shape = 'u8[294912]{0}', space=vmem, size = 0x48000, scoped, tag = 'input window, operand 4, single buffered']
    #allocation9 [shape = 's32[1]{0}', space=sflag, size = 0x4, scoped, tag = 'scoped memory for tpu_custom_call.1']
    #allocation10 [shape = 'u8[65536]{0}', space=vmem, size = 0x10000, scoped, tag = 'output window, operand 0']
    %11 = vsyncpa [#allocation3], 0
    %s12 = scalar_lea.sflag [#allocation3], 1
    %13 = vsyncpa %s12, 0
    %14 = vsyncpa [#allocation6], 0
    %s15 = scalar_lea.sflag [#allocation6], 1
    %16 = vsyncpa %s15, 0
    %17 = vsyncpa [#allocation9], 0
    %18 = vsyncpa [#allocation4], 0
    %s19 = scalar_lea.sflag [#allocation4], 1
    %20 = vsyncpa %s19, 0
    loop: start=0, step=1, limit=10
    $region2: #{tpu_custom_call.1} parent=1 // loop_pre_header
      _
    $region3: #{tpu_custom_call.1} parent=1 // loop_header
      %s22 = sphi 0, %s26
      %p23 = scmp.ge.s32.totalorder %s22, 10
      %s29 = sphi 0, %s41
      %s30 = sphi 0, %s37
      %s31 = sphi 0, %s29
      %s32 = sphi 0, %s30
      %s33 = sphi 0, %s31
      %s34 = sphi 0, %s32
      %s46 = sphi 0, %s48
      %s49 = sphi 0, %s46
      %s50 = sphi 0, %s49
      %s66 = sphi 0, %s50
      %s76 = sphi 0, %s78
      %s79 = sphi 0, %s76
      %s80 = sphi 0, %s79
      %s96 = sphi 0, %s80
      %s100 = sphi 0, %s100
      %s102 = sphi 0, %s100
      %s103 = sphi 0, %s102
      %s117 = sphi 0, %s103
      %s121 = sphi 0, %s121
      %s123 = sphi 0, %s121
      %s124 = sphi 0, %s123
      %s138 = sphi 0, %s124
      %s142 = sphi 0, %s142
      %s144 = sphi 0, %s142
      %s145 = sphi 0, %s144
      %s159 = sphi 0, %s145
      %s163 = sphi 0, %s163
      %s165 = sphi 0, %s163
      %s166 = sphi 0, %s165
      %s180 = sphi 0, %s166
      %s188 = sphi 0, %s190
      %s191 = sphi 0, %s188
      %s192 = sphi 0, %s191
      %s208 = sphi 0, %s192
    $region4: #{tpu_custom_call.1} parent=1 // loop_header_branch
      %25 = sbr.rel (%p23) target = $region8
    $region5: #{tpu_custom_call.1} parent=1 // loop_body
      %s27 = ssub.s32 %s22, 1
      %s28 = ssub.s32 %s22, 2
      %s35 = sadd.s32 1, %s30
      %p36 = scmp.ge.s32.totalorder %s35, 4
      %s37 = scalar_select %p36, 0, %s35
      %s38 = sadd.s32 1, %s29
      %s39 = scalar_select %p36, %s38, %s29
      %p40 = scmp.ge.s32.totalorder %s39, 2
      %s41 = scalar_select %p40, 0, %s39
      %s42 = ssub.s32 %s29, %s41
      %s43 = ssub.s32 %s30, %s37
      %s44 = sor.u32 %s42, %s43
      %p45 = scmp.eq.s32.totalorder %s44, 0
      %s47 = sadd.s32 %s46, 1
      %s48 = scalar_select %p45, %s46, %s47
      %p51 = pneg %p45
      %p52 = scmp.eq.s32.totalorder %s22, 7
      %p53 = por %p51, %p52
      %p54 = scmp.ne.s32.totalorder %s46, %s49
      %p55 = scmp.eq.s32.totalorder %s22, 0
      %p56 = por %p54, %p55
      %p57 = scmp.ne.s32.totalorder %s46, %s49
      %p58 = scmp.eq.s32.totalorder %s27, 7
      %p59 = por %p57, %p58
      %p60 = scmp.ne.s32.totalorder %s49, %s50
      %p61 = scmp.eq.s32.totalorder %s27, 0
      %p62 = por %p60, %p61
      %p63 = scmp.ne.s32.totalorder %s49, %s50
      %p64 = scmp.eq.s32.totalorder %s28, 7
      %p65 = por %p63, %p64
      %p67 = scmp.ne.s32.totalorder %s50, %s66
      %p68 = scmp.eq.s32.totalorder %s28, 0
      %p69 = por %p67, %p68
      %s70 = sadd.s32 %s30, 1
      %s71 = sadd.s32 %s37, 1
      %s72 = ssub.s32 %s29, %s41
      %s73 = ssub.s32 %s70, %s71
      %s74 = sor.u32 %s72, %s73
      %p75 = scmp.eq.s32.totalorder %s74, 0
      %s77 = sadd.s32 %s76, 1
      %s78 = scalar_select %p75, %s76, %s77
      %p81 = pneg %p75
      %p82 = scmp.eq.s32.totalorder %s22, 7
      %p83 = por %p81, %p82
      %p84 = scmp.ne.s32.totalorder %s76, %s79
      %p85 = scmp.eq.s32.totalorder %s22, 0
      %p86 = por %p84, %p85
      %p87 = scmp.ne.s32.totalorder %s76, %s79
      %p88 = scmp.eq.s32.totalorder %s27, 7
      %p89 = por %p87, %p88
      %p90 = scmp.ne.s32.totalorder %s79, %s80
      %p91 = scmp.eq.s32.totalorder %s27, 0
      %p92 = por %p90, %p91
      %p93 = scmp.ne.s32.totalorder %s79, %s80
      %p94 = scmp.eq.s32.totalorder %s28, 7
      %p95 = por %p93, %p94
      %p97 = scmp.ne.s32.totalorder %s80, %s96
      %p98 = scmp.eq.s32.totalorder %s28, 0
      %p99 = por %p97, %p98
      %s101 = sadd.s32 %s100, 1
      %p104 = scmp.eq.s32.totalorder %s22, 7
      %p105 = scmp.ne.s32.totalorder %s100, %s102
      %p106 = scmp.eq.s32.totalorder %s22, 0
      %p107 = por %p105, %p106
      %p108 = scmp.ne.s32.totalorder %s100, %s102
      %p109 = scmp.eq.s32.totalorder %s27, 7
      %p110 = por %p108, %p109
      %p111 = scmp.ne.s32.totalorder %s102, %s103
      %p112 = scmp.eq.s32.totalorder %s27, 0
      %p113 = por %p111, %p112
      %p114 = scmp.ne.s32.totalorder %s102, %s103
      %p115 = scmp.eq.s32.totalorder %s28, 7
      %p116 = por %p114, %p115
      %p118 = scmp.ne.s32.totalorder %s103, %s117
      %p119 = scmp.eq.s32.totalorder %s28, 0
      %p120 = por %p118, %p119
      %s122 = sadd.s32 %s121, 1
      %p125 = scmp.eq.s32.totalorder %s22, 7
      %p126 = scmp.ne.s32.totalorder %s121, %s123
      %p127 = scmp.eq.s32.totalorder %s22, 0
      %p128 = por %p126, %p127
      %p129 = scmp.ne.s32.totalorder %s121, %s123
      %p130 = scmp.eq.s32.totalorder %s27, 7
      %p131 = por %p129, %p130
      %p132 = scmp.ne.s32.totalorder %s123, %s124
      %p133 = scmp.eq.s32.totalorder %s27, 0
      %p134 = por %p132, %p133
      %p135 = scmp.ne.s32.totalorder %s123, %s124
      %p136 = scmp.eq.s32.totalorder %s28, 7
      %p137 = por %p135, %p136
      %p139 = scmp.ne.s32.totalorder %s124, %s138
      %p140 = scmp.eq.s32.totalorder %s28, 0
      %p141 = por %p139, %p140
      %s143 = sadd.s32 %s142, 1
      %p146 = scmp.eq.s32.totalorder %s22, 7
      %p147 = scmp.ne.s32.totalorder %s142, %s144
      %p148 = scmp.eq.s32.totalorder %s22, 0
      %p149 = por %p147, %p148
      %p150 = scmp.ne.s32.totalorder %s142, %s144
      %p151 = scmp.eq.s32.totalorder %s27, 7
      %p152 = por %p150, %p151
      %p153 = scmp.ne.s32.totalorder %s144, %s145
      %p154 = scmp.eq.s32.totalorder %s27, 0
      %p155 = por %p153, %p154
      %p156 = scmp.ne.s32.totalorder %s144, %s145
      %p157 = scmp.eq.s32.totalorder %s28, 7
      %p158 = por %p156, %p157
      %p160 = scmp.ne.s32.totalorder %s145, %s159
      %p161 = scmp.eq.s32.totalorder %s28, 0
      %p162 = por %p160, %p161
      %s164 = sadd.s32 %s163, 1
      %p167 = scmp.eq.s32.totalorder %s22, 7
      %p168 = scmp.ne.s32.totalorder %s163, %s165
      %p169 = scmp.eq.s32.totalorder %s22, 0
      %p170 = por %p168, %p169
      %p171 = scmp.ne.s32.totalorder %s163, %s165
      %p172 = scmp.eq.s32.totalorder %s27, 7
      %p173 = por %p171, %p172
      %p174 = scmp.ne.s32.totalorder %s165, %s166
      %p175 = scmp.eq.s32.totalorder %s27, 0
      %p176 = por %p174, %p175
      %p177 = scmp.ne.s32.totalorder %s165, %s166
      %p178 = scmp.eq.s32.totalorder %s28, 7
      %p179 = por %p177, %p178
      %p181 = scmp.ne.s32.totalorder %s166, %s180
      %p182 = scmp.eq.s32.totalorder %s28, 0
      %p183 = por %p181, %p182
      %s184 = ssub.s32 %s29, %s41
      %s185 = ssub.s32 %s30, %s37
      %s186 = sor.u32 %s184, %s185
      %p187 = scmp.eq.s32.totalorder %s186, 0
      %s189 = sadd.s32 %s188, 1
      %s190 = scalar_select %p187, %s188, %s189
      %p193 = pneg %p187
      %p194 = scmp.eq.s32.totalorder %s22, 7
      %p195 = por %p193, %p194
      %p196 = scmp.ne.s32.totalorder %s188, %s191
      %p197 = scmp.eq.s32.totalorder %s22, 0
      %p198 = por %p196, %p197
      %p199 = scmp.ne.s32.totalorder %s188, %s191
      %p200 = scmp.eq.s32.totalorder %s27, 7
      %p201 = por %p199, %p200
      %p202 = scmp.ne.s32.totalorder %s191, %s192
      %p203 = scmp.eq.s32.totalorder %s27, 0
      %p204 = por %p202, %p203
      %p205 = scmp.ne.s32.totalorder %s191, %s192
      %p206 = scmp.eq.s32.totalorder %s28, 7
      %p207 = por %p205, %p206
      %p209 = scmp.ne.s32.totalorder %s192, %s208
      %p210 = scmp.eq.s32.totalorder %s28, 0
      %p211 = por %p209, %p210
      %p212 = scmp.le.s32.totalorder 1, %s22
      %p213 = scmp.lt.s32.totalorder %s22, 9
      %p214 = pnand %p212, %p213
      %p215 = pneg %p214
      // Predicated region
      $region9: #{tpu_custom_call.1} parent=5 // pred_check
        _
      $region10: #{tpu_custom_call.1} parent=5 // pred_check_branch
        %217 = sbr.rel (%p214) target = $region12
      $region11: #{tpu_custom_call.1} parent=5 // pred_region
        %s218 = ssub.s32 %s22, 1
        // Predicated region
        $region13: #{tpu_custom_call.1} parent=11 // pred_check
          %p219 = pneg %p113
        $region14: #{tpu_custom_call.1} parent=11 // pred_check_branch
          %221 = sbr.rel (%p219) target = $region16
        $region15: #{tpu_custom_call.1} parent=11 // pred_region
          %s223 = ssub.s32 9216, 9216
          %224 = vsyncadd [#allocation6], %s223
          %s225 = sshll.u32 [#allocation7], 4
          %s226 = int_to_ptr.vmem [resolvable:$true] %s225
          %231 = dma.hbm_to_vmem [thread:$0]  %s2, 9216, %s226, [#allocation6], 64, 64, 4
        $region16: #{tpu_custom_call.1} parent=11 // pred_fallthru
          _
        // Predicated region
        $region17: #{tpu_custom_call.1} parent=11 // pred_check
          %p232 = pneg %p134
        $region18: #{tpu_custom_call.1} parent=11 // pred_check_branch
          %234 = sbr.rel (%p232) target = $region20
        $region19: #{tpu_custom_call.1} parent=11 // pred_region
          _
        $region20: #{tpu_custom_call.1} parent=11 // pred_fallthru
          _
        // Predicated region
        $region21: #{tpu_custom_call.1} parent=11 // pred_check
          %p235 = pneg %p155
        $region22: #{tpu_custom_call.1} parent=11 // pred_check_branch
          %237 = sbr.rel (%p235) target = $region24
        $region23: #{tpu_custom_call.1} parent=11 // pred_region
          %s239 = ssub.s32 9216, 9216
          %240 = vsyncadd [#allocation9], %s239
          %s241 = sshll.u32 [#allocation8], 4
          %s242 = int_to_ptr.vmem [resolvable:$true] %s241
          %247 = dma.hbm_to_vmem [thread:$0]  %s4, 9216, %s242, [#allocation9], 64, 64, 4
        $region24: #{tpu_custom_call.1} parent=11 // pred_fallthru
          _
        // Predicated region
        $region25: #{tpu_custom_call.1} parent=11 // pred_check
          %p248 = pneg %p176
        $region26: #{tpu_custom_call.1} parent=11 // pred_check_branch
          %250 = sbr.rel (%p248) target = $region28
        $region27: #{tpu_custom_call.1} parent=11 // pred_region
          _
        $region28: #{tpu_custom_call.1} parent=11 // pred_fallthru
          _
      $region12: #{tpu_custom_call.1} parent=5 // pred_fallthru
        _
      %p251 = scmp.lt.s32.totalorder %s22, 8
      // Predicated region
      $region29: #{tpu_custom_call.1} parent=5 // pred_check
        %p252 = pneg %p251
      $region30: #{tpu_custom_call.1} parent=5 // pred_check_branch
        %254 = sbr.rel (%p252) target = $region32
      $region31: #{tpu_custom_call.1} parent=5 // pred_region
        // Predicated region
        $region33: #{tpu_custom_call.1} parent=31 // pred_check
          %p255 = pneg %p56
        $region34: #{tpu_custom_call.1} parent=31 // pred_check_branch
          %257 = sbr.rel (%p255) target = $region36
        $region35: #{tpu_custom_call.1} parent=31 // pred_region
          %s258 = sand.u32 %s46, 1
          %s259 = scalar_lea.sflag [#allocation3], %s258
          %s260 = sand.u32 %s46, 1
          %s261 = smul.addr %s260, 32
          %s262 = scalar_lea.vmem [#allocation2], %s261
          %s263 = smul.u32 4, %s30
          %s265 = ssub.s32 512, 512
          %266 = vsyncadd %s259, %s265
          %s267 = smul.addr %s263, 2
          %s268 = smul.addr %s29, 40
          %s269 = sadd.s32 %s267, %s268
          %s270 = smul.addr %s269, 64
          %s271 = scalar_lea.hbm %s0, %s270
          %s272 = sshll.u32 %s262, 4
          %s273 = int_to_ptr.vmem [resolvable:$true] %s272
          %278 = dma.hbm_to_vmem [thread:$0]  %s271, 512, %s273, %s259, 64, 64, 4
        $region36: #{tpu_custom_call.1} parent=31 // pred_fallthru
          _
        // Predicated region
        $region37: #{tpu_custom_call.1} parent=31 // pred_check
          %p279 = pneg %p86
        $region38: #{tpu_custom_call.1} parent=31 // pred_check_branch
          %281 = sbr.rel (%p279) target = $region40
        $region39: #{tpu_custom_call.1} parent=31 // pred_region
          %s282 = sand.u32 %s22, 1
          %s283 = scalar_lea.sflag [#allocation6], %s282
          %s284 = sand.u32 %s76, 1
          %s285 = smul.addr %s284, 32
          %s286 = scalar_lea.vmem [#allocation5], %s285
          %s287 = sadd.s32 %s30, 1
          %s288 = smul.u32 4, %s287
          %s290 = ssub.s32 512, 512
          %291 = vsyncadd %s283, %s290
          %s292 = smul.addr %s288, 2
          %s293 = smul.addr %s29, 40
          %s294 = sadd.s32 %s292, %s293
          %s295 = smul.addr %s294, 64
          %s296 = scalar_lea.hbm %s1, %s295
          %s297 = sshll.u32 %s286, 4
          %s298 = int_to_ptr.vmem [resolvable:$true] %s297
          %303 = dma.hbm_to_vmem [thread:$0]  %s296, 512, %s298, %s283, 64, 64, 4
        $region40: #{tpu_custom_call.1} parent=31 // pred_fallthru
          _
      $region32: #{tpu_custom_call.1} parent=5 // pred_fallthru
        _
      %p304 = scmp.le.s32.totalorder 1, %s22
      %p305 = scmp.lt.s32.totalorder %s22, 9
      %p306 = pnand %p304, %p305
      %p307 = pneg %p306
      // Predicated region
      $region41: #{tpu_custom_call.1} parent=5 // pred_check
        _
      $region42: #{tpu_custom_call.1} parent=5 // pred_check_branch
        %309 = sbr.rel (%p306) target = $region44
      $region43: #{tpu_custom_call.1} parent=5 // pred_region
        %s310 = ssub.s32 %s22, 1
        %s311 = sand.u32 %s49, 1
        %s312 = scalar_lea.sflag [#allocation3], %s311
        %s313 = sand.u32 %s49, 1
        %s314 = smul.addr %s313, 32
        %s315 = scalar_lea.vmem [#allocation2], %s314
        // Predicated region
        $region45: #{tpu_custom_call.1} parent=43 // pred_check
          %p316 = pneg %p62
        $region46: #{tpu_custom_call.1} parent=43 // pred_check_branch
          %318 = sbr.rel (%p316) target = $region48
        $region47: #{tpu_custom_call.1} parent=43 // pred_region
          %319 = dma.done %s312, 512
        $region48: #{tpu_custom_call.1} parent=43 // pred_fallthru
          _
        %s320 = sand.u32 %s27, 1
        %s321 = scalar_lea.sflag [#allocation6], %s320
        %s322 = sand.u32 %s79, 1
        %s323 = smul.addr %s322, 32
        %s324 = scalar_lea.vmem [#allocation5], %s323
        // Predicated region
        $region49: #{tpu_custom_call.1} parent=43 // pred_check
          %p325 = pneg %p92
        $region50: #{tpu_custom_call.1} parent=43 // pred_check_branch
          %327 = sbr.rel (%p325) target = $region52
        $region51: #{tpu_custom_call.1} parent=43 // pred_region
          %328 = dma.done %s321, 512
        $region52: #{tpu_custom_call.1} parent=43 // pred_fallthru
          _
        // Predicated region
        $region53: #{tpu_custom_call.1} parent=43 // pred_check
          %p329 = pneg %p113
        $region54: #{tpu_custom_call.1} parent=43 // pred_check_branch
          %331 = sbr.rel (%p329) target = $region56
        $region55: #{tpu_custom_call.1} parent=43 // pred_region
          %332 = dma.done [#allocation6], 9216
        $region56: #{tpu_custom_call.1} parent=43 // pred_fallthru
          _
        // Predicated region
        $region57: #{tpu_custom_call.1} parent=43 // pred_check
          %p333 = pneg %p155
        $region58: #{tpu_custom_call.1} parent=43 // pred_check_branch
          %335 = sbr.rel (%p333) target = $region60
        $region59: #{tpu_custom_call.1} parent=43 // pred_region
          %336 = dma.done [#allocation9], 9216
        $region60: #{tpu_custom_call.1} parent=43 // pred_fallthru
          _
        %s337 = sand.u32 %s49, 1
        %s338 = scalar_lea.sflag [#allocation3], %s337
        %s339 = sand.u32 %s49, 1
        %s340 = smul.addr %s339, 32
        %s341 = scalar_lea.vmem [#allocation2], %s340
        %p342 = pneg %p62
        %p343 = pneg %p59
        %s344 = sand.u32 %s27, 1
        %s345 = scalar_lea.sflag [#allocation6], %s344
        %s346 = sand.u32 %s79, 1
        %s347 = smul.addr %s346, 32
        %s348 = scalar_lea.vmem [#allocation5], %s347
        %p349 = pneg %p92
        %p350 = pneg %p89
        %p351 = pneg %p113
        %p352 = pneg %p110
        %p353 = pneg %p134
        %p354 = pneg %p131
        %p355 = pneg %p155
        %p356 = pneg %p152
        %p357 = pneg %p176
        %p358 = pneg %p173
        %p359 = pneg %p204
        %p360 = pneg %p201
        %s361 = sand.u32 %s191, 1
        %s362 = scalar_lea.sflag [#allocation4], %s361
        %s363 = sand.u32 %s191, 1
        %s364 = smul.addr %s363, 64
        %s365 = scalar_lea.vmem [#allocation10], %s364
        %s366 = smul.u32 4, %s32
        %s367 = sadd.s32 %s32, 1
        %s368 = smul.u32 4, %s367
        %s369 = smul.u32 4, %s32
        %v371 = vld [vmem:[%s315] sm:$0xf]
        %v372 = vld [vmem:[%s315 + $0x4] sm:$0xf]
        %v373 = vld [vmem:[%s315 + $0x8] sm:$0xf]
        %v374 = vld [vmem:[%s315 + $0xc] sm:$0xf]
        %v375 = vld [vmem:[%s315 + $0x10] sm:$0xf]
        %v376 = vld [vmem:[%s315 + $0x14] sm:$0xf]
        %v377 = vld [vmem:[%s315 + $0x18] sm:$0xf]
        %v378 = vld [vmem:[%s315 + $0x1c] sm:$0xf]
        %v379 = vld [vmem:[%s324] sm:$0xf]
        %v380 = vld [vmem:[%s324 + $0x4] sm:$0xf]
        %v381 = vld [vmem:[%s324 + $0x8] sm:$0xf]
        %v382 = vld [vmem:[%s324 + $0xc] sm:$0xf]
        %v383 = vld [vmem:[%s324 + $0x10] sm:$0xf]
        %v384 = vld [vmem:[%s324 + $0x14] sm:$0xf]
        %v385 = vld [vmem:[%s324 + $0x18] sm:$0xf]
        %v386 = vld [vmem:[%s324 + $0x1c] sm:$0xf]
        %v403 = vunpack.c.l.b16 %v371
        %v404 = vunpack.c.l.b16 %v372
        %v405 = vunpack.c.l.b16 %v373
        %v406 = vunpack.c.l.b16 %v374
        %v407 = vunpack.c.l.b16 %v375
        %v408 = vunpack.c.l.b16 %v376
        %v409 = vunpack.c.l.b16 %v377
        %v410 = vunpack.c.l.b16 %v378
        %v411 = vunpack.c.l.b16 %v379
        %v412 = vunpack.c.l.b16 %v380
        %v413 = vunpack.c.l.b16 %v381
        %v414 = vunpack.c.l.b16 %v382
        %v415 = vunpack.c.l.b16 %v383
        %v416 = vunpack.c.l.b16 %v384
        %v417 = vunpack.c.l.b16 %v385
        %v418 = vunpack.c.l.b16 %v386
        %v419 = vpack.c.b16 %v404, %v403
        %v420 = vpack.c.b16 %v406, %v405
        %v421 = vpack.c.b16 %v408, %v407
        %v422 = vpack.c.b16 %v410, %v409
        %v423 = vpack.c.b16 %v412, %v411
        %v424 = vpack.c.b16 %v414, %v413
        %v425 = vpack.c.b16 %v416, %v415
        %v426 = vpack.c.b16 %v418, %v417
        %v428 = vshrl.u32 %v419, 16
        %v430 = vrot.slane %v428, 7
        %v431 = vshll.u32 %v419, 16
        %v433 = vor.u32 %v430, %v431
        %v435 = vshrl.u32 %v420, 16
        %v437 = vrot.slane %v435, 7
        %v438 = vshll.u32 %v420, 16
        %v440 = vor.u32 %v437, %v438
        %v442 = vshrl.u32 %v421, 16
        %v444 = vrot.slane %v442, 7
        %v445 = vshll.u32 %v421, 16
        %v447 = vor.u32 %v444, %v445
        %v449 = vshrl.u32 %v422, 16
        %v451 = vrot.slane %v449, 7
        %v452 = vshll.u32 %v422, 16
        %v454 = vor.u32 %v451, %v452
        %v456 = vshrl.u32 %v423, 16
        %v458 = vrot.slane %v456, 7
        %v459 = vshll.u32 %v423, 16
        %v461 = vor.u32 %v458, %v459
        %v463 = vshrl.u32 %v424, 16
        %v465 = vrot.slane %v463, 7
        %v466 = vshll.u32 %v424, 16
        %v468 = vor.u32 %v465, %v466
        %v470 = vshrl.u32 %v425, 16
        %v472 = vrot.slane %v470, 7
        %v473 = vshll.u32 %v425, 16
        %v475 = vor.u32 %v472, %v473
        %v477 = vshrl.u32 %v426, 16
        %v479 = vrot.slane %v477, 7
        %v480 = vshll.u32 %v426, 16
        %v482 = vor.u32 %v479, %v480
        %vm499 = vcmask 1040384
        %vm500 = vsmask.f32 256
        %vm501 = vmand %vm499, %vm500
        %v502 = vsel %vm501, 0, %v433
        %v503 = vsel %vm501, 0, %v440
        %v504 = vsel %vm501, 0, %v447
        %v505 = vsel %vm501, 0, %v454
        %v506 = vsel %vm501, 0, %v461
        %v507 = vsel %vm501, 0, %v468
        %v508 = vsel %vm501, 0, %v475
        %v509 = vsel %vm501, 0, %v482
        %v510 = vsel %vm501, %v430, 0
        %v511 = vsel %vm501, %v437, 0
        %v512 = vsel %vm501, %v444, 0
        %v513 = vsel %vm501, %v451, 0
        %v514 = vsel %vm501, %v458, 0
        %v515 = vsel %vm501, %v465, 0
        %v516 = vsel %vm501, %v472, 0
        %v517 = vsel %vm501, %v479, 0
        %vm518 = vsmask.f32 7424
        %v520 = vshrl.u32 %v502, 16
        %v522 = vshll.u32 %v502, 16
        %v524 = vrot.slane %v522, 1
        %v525 = vor.u32 %v520, %v524
        %v527 = vshll.u32 %v510, 16
        %v529 = vrot.slane %v527, 1
        %v530 = vsel %vm518, %v525, %v529
        %v532 = vshrl.u32 %v503, 16
        %v534 = vshll.u32 %v503, 16
        %v536 = vrot.slane %v534, 1
        %v537 = vor.u32 %v532, %v536
        %v539 = vshll.u32 %v511, 16
        %v541 = vrot.slane %v539, 1
        %v542 = vsel %vm518, %v537, %v541
        %v544 = vshrl.u32 %v504, 16
        %v546 = vshll.u32 %v504, 16
        %v548 = vrot.slane %v546, 1
        %v549 = vor.u32 %v544, %v548
        %v551 = vshll.u32 %v512, 16
        %v553 = vrot.slane %v551, 1
        %v554 = vsel %vm518, %v549, %v553
        %v556 = vshrl.u32 %v505, 16
        %v558 = vshll.u32 %v505, 16
        %v560 = vrot.slane %v558, 1
        %v561 = vor.u32 %v556, %v560
        %v563 = vshll.u32 %v513, 16
        %v565 = vrot.slane %v563, 1
        %v566 = vsel %vm518, %v561, %v565
        %v568 = vshrl.u32 %v506, 16
        %v570 = vshll.u32 %v506, 16
        %v572 = vrot.slane %v570, 1
        %v573 = vor.u32 %v568, %v572
        %v575 = vshll.u32 %v514, 16
        %v577 = vrot.slane %v575, 1
        %v578 = vsel %vm518, %v573, %v577
        %v580 = vshrl.u32 %v507, 16
        %v582 = vshll.u32 %v507, 16
        %v584 = vrot.slane %v582, 1
        %v585 = vor.u32 %v580, %v584
        %v587 = vshll.u32 %v515, 16
        %v589 = vrot.slane %v587, 1
        %v590 = vsel %vm518, %v585, %v589
        %vm609 = vcmask 1046528
        %v610 = vrot.slane %v502, 1
        %v611 = vrot.slane %v510, 1
        %v612 = vsel %vm609, %v610, %v611
        %v613 = vrot.slane %v503, 1
        %v614 = vrot.slane %v511, 1
        %v615 = vsel %vm609, %v613, %v614
        %v616 = vrot.slane %v504, 1
        %v617 = vrot.slane %v512, 1
        %v618 = vsel %vm609, %v616, %v617
        %v619 = vrot.slane %v505, 1
        %v620 = vrot.slane %v513, 1
        %v621 = vsel %vm609, %v619, %v620
        %v622 = vrot.slane %v506, 1
        %v623 = vrot.slane %v514, 1
        %v624 = vsel %vm609, %v622, %v623
        %v625 = vrot.slane %v507, 1
        %v626 = vrot.slane %v515, 1
        %v627 = vsel %vm609, %v625, %v626
        %v635 = vshrl.u32 %v508, 16
        %v637 = vshll.u32 %v508, 16
        %v639 = vrot.slane %v637, 1
        %v640 = vor.u32 %v635, %v639
        %v642 = vshll.u32 %v516, 16
        %v644 = vrot.slane %v642, 1
        %v645 = vsel %vm518, %v640, %v644
        %v649 = vrot.slane %v508, 1
        %v650 = vrot.slane %v516, 1
        %v651 = vsel %vm609, %v649, %v650
        %v654 = vshrl.u32 %v509, 16
        %v656 = vshll.u32 %v509, 16
        %v658 = vrot.slane %v656, 1
        %v659 = vor.u32 %v654, %v658
        %v661 = vshll.u32 %v517, 16
        %v663 = vrot.slane %v661, 1
        %v664 = vsel %vm518, %v659, %v663
        %v668 = vrot.slane %v509, 1
        %v669 = vrot.slane %v517, 1
        %v670 = vsel %vm609, %v668, %v669
        %v672 = vld [vmem:[#allocation7] sm:$0xf]
        %v673 = vld [vmem:[#allocation7 + $0x4] sm:$0xf]
        %v674 = vld [vmem:[#allocation7 + $0x8] sm:$0xf]
        %v675 = vld [vmem:[#allocation7 + $0xc] sm:$0xf]
        %v676 = vld [vmem:[#allocation7 + $0x10] sm:$0xf]
        %v677 = vld [vmem:[#allocation7 + $0x14] sm:$0xf]
        %v678 = vld [vmem:[#allocation7 + $0x18] sm:$0xf]
        %v679 = vld [vmem:[#allocation7 + $0x1c] sm:$0xf]
        %v680 = vld [vmem:[#allocation7 + $0x20] sm:$0xf]
        %v681 = vld [vmem:[#allocation7 + $0x24] sm:$0xf]
        %v682 = vld [vmem:[#allocation7 + $0x28] sm:$0xf]
        %v683 = vld [vmem:[#allocation7 + $0x2c] sm:$0xf]
        %v684 = vld [vmem:[#allocation7 + $0x30] sm:$0xf]
        %v685 = vld [vmem:[#allocation7 + $0x34] sm:$0xf]
        %v686 = vld [vmem:[#allocation7 + $0x38] sm:$0xf]
        %v687 = vld [vmem:[#allocation7 + $0x3c] sm:$0xf]
        %v688 = vld [vmem:[#allocation7 + $0x40] sm:$0xf]
        %v689 = vld [vmem:[#allocation7 + $0x44] sm:$0xf]
        %v690 = vld [vmem:[#allocation7 + $0x48] sm:$0xf]
        %v691 = vld [vmem:[#allocation7 + $0x4c] sm:$0xf]
        %v692 = vld [vmem:[#allocation7 + $0x50] sm:$0xf]
        %v693 = vld [vmem:[#allocation7 + $0x54] sm:$0xf]
        %v694 = vld [vmem:[#allocation7 + $0x58] sm:$0xf]
        %v695 = vld [vmem:[#allocation7 + $0x5c] sm:$0xf]
        %v696 = vld [vmem:[#allocation7 + $0x60] sm:$0xf]
        %v697 = vld [vmem:[#allocation7 + $0x64] sm:$0xf]
        %v698 = vld [vmem:[#allocation7 + $0x68] sm:$0xf]
        %v699 = vld [vmem:[#allocation7 + $0x6c] sm:$0xf]
        %v700 = vld [vmem:[#allocation7 + $0x70] sm:$0xf]
        %v701 = vld [vmem:[#allocation7 + $0x74] sm:$0xf]
        %v702 = vld [vmem:[#allocation7 + $0x78] sm:$0xf]
        %v703 = vld [vmem:[#allocation7 + $0x7c] sm:$0xf]
        %v704 = vld [vmem:[#allocation7 + $0x80] sm:$0xf]
        %v705 = vld [vmem:[#allocation7 + $0x84] sm:$0xf]
        %v706 = vld [vmem:[#allocation7 + $0x88] sm:$0xf]
        %v707 = vld [vmem:[#allocation7 + $0x8c] sm:$0xf]
        %v708 = vld [vmem:[#allocation7 + $0x90] sm:$0xf]
        %v709 = vld [vmem:[#allocation7 + $0x94] sm:$0xf]
        %v710 = vld [vmem:[#allocation7 + $0x98] sm:$0xf]
        %v711 = vld [vmem:[#allocation7 + $0x9c] sm:$0xf]
        %v712 = vld [vmem:[#allocation7 + $0xa0] sm:$0xf]
        %v713 = vld [vmem:[#allocation7 + $0xa4] sm:$0xf]
        %v714 = vld [vmem:[#allocation7 + $0xa8] sm:$0xf]
        %v715 = vld [vmem:[#allocation7 + $0xac] sm:$0xf]
        %v716 = vld [vmem:[#allocation7 + $0xb0] sm:$0xf]
        %v717 = vld [vmem:[#allocation7 + $0xb4] sm:$0xf]
        %v718 = vld [vmem:[#allocation7 + $0xb8] sm:$0xf]
        %v719 = vld [vmem:[#allocation7 + $0xbc] sm:$0xf]
        %v720 = vld [vmem:[#allocation7 + $0xc0] sm:$0xf]
        %v721 = vld [vmem:[#allocation7 + $0xc4] sm:$0xf]
        %v722 = vld [vmem:[#allocation7 + $0xc8] sm:$0xf]
        %v723 = vld [vmem:[#allocation7 + $0xcc] sm:$0xf]
        %v724 = vld [vmem:[#allocation7 + $0xd0] sm:$0xf]
        %v725 = vld [vmem:[#allocation7 + $0xd4] sm:$0xf]
        %v726 = vld [vmem:[#allocation7 + $0xd8] sm:$0xf]
        %v727 = vld [vmem:[#allocation7 + $0xdc] sm:$0xf]
        %v728 = vld [vmem:[#allocation7 + $0xe0] sm:$0xf]
        %v729 = vld [vmem:[#allocation7 + $0xe4] sm:$0xf]
        %v730 = vld [vmem:[#allocation7 + $0xe8] sm:$0xf]
        %v731 = vld [vmem:[#allocation7 + $0xec] sm:$0xf]
        %v732 = vld [vmem:[#allocation7 + $0xf0] sm:$0xf]
        %v733 = vld [vmem:[#allocation7 + $0xf4] sm:$0xf]
        %v734 = vld [vmem:[#allocation7 + $0xf8] sm:$0xf]
        %v735 = vld [vmem:[#allocation7 + $0xfc] sm:$0xf]
        %v736 = vld [vmem:[#allocation7 + $0x100] sm:$0xf]
        %v737 = vld [vmem:[#allocation7 + $0x104] sm:$0xf]
        %v738 = vld [vmem:[#allocation7 + $0x108] sm:$0xf]
        %v739 = vld [vmem:[#allocation7 + $0x10c] sm:$0xf]
        %v740 = vld [vmem:[#allocation7 + $0x110] sm:$0xf]
        %v741 = vld [vmem:[#allocation7 + $0x114] sm:$0xf]
        %v742 = vld [vmem:[#allocation7 + $0x118] sm:$0xf]
        %v743 = vld [vmem:[#allocation7 + $0x11c] sm:$0xf]
        %v744 = vld [vmem:[#allocation7 + $0x120] sm:$0xf]
        %v745 = vld [vmem:[#allocation7 + $0x124] sm:$0xf]
        %v746 = vld [vmem:[#allocation7 + $0x128] sm:$0xf]
        %v747 = vld [vmem:[#allocation7 + $0x12c] sm:$0xf]
        %v748 = vld [vmem:[#allocation7 + $0x130] sm:$0xf]
        %v749 = vld [vmem:[#allocation7 + $0x134] sm:$0xf]
        %v750 = vld [vmem:[#allocation7 + $0x138] sm:$0xf]
        %v751 = vld [vmem:[#allocation7 + $0x13c] sm:$0xf]
        %v752 = vld [vmem:[#allocation7 + $0x140] sm:$0xf]
        %v753 = vld [vmem:[#allocation7 + $0x144] sm:$0xf]
        %v754 = vld [vmem:[#allocation7 + $0x148] sm:$0xf]
        %v755 = vld [vmem:[#allocation7 + $0x14c] sm:$0xf]
        %v756 = vld [vmem:[#allocation7 + $0x150] sm:$0xf]
        %v757 = vld [vmem:[#allocation7 + $0x154] sm:$0xf]
        %v758 = vld [vmem:[#allocation7 + $0x158] sm:$0xf]
        %v759 = vld [vmem:[#allocation7 + $0x15c] sm:$0xf]
        %v760 = vld [vmem:[#allocation7 + $0x160] sm:$0xf]
        %v761 = vld [vmem:[#allocation7 + $0x164] sm:$0xf]
        %v762 = vld [vmem:[#allocation7 + $0x168] sm:$0xf]
        %v763 = vld [vmem:[#allocation7 + $0x16c] sm:$0xf]
        %v764 = vld [vmem:[#allocation7 + $0x170] sm:$0xf]
        %v765 = vld [vmem:[#allocation7 + $0x174] sm:$0xf]
        %v766 = vld [vmem:[#allocation7 + $0x178] sm:$0xf]
        %v767 = vld [vmem:[#allocation7 + $0x17c] sm:$0xf]
        %v768 = vld [vmem:[#allocation7 + $0x180] sm:$0xf]
        %v769 = vld [vmem:[#allocation7 + $0x184] sm:$0xf]
        %v770 = vld [vmem:[#allocation7 + $0x188] sm:$0xf]
        %v771 = vld [vmem:[#allocation7 + $0x18c] sm:$0xf]
        %v772 = vld [vmem:[#allocation7 + $0x190] sm:$0xf]
        %v773 = vld [vmem:[#allocation7 + $0x194] sm:$0xf]
        %v774 = vld [vmem:[#allocation7 + $0x198] sm:$0xf]
        %v775 = vld [vmem:[#allocation7 + $0x19c] sm:$0xf]
        %v776 = vld [vmem:[#allocation7 + $0x1a0] sm:$0xf]
        %v777 = vld [vmem:[#allocation7 + $0x1a4] sm:$0xf]
        %v778 = vld [vmem:[#allocation7 + $0x1a8] sm:$0xf]
        %v779 = vld [vmem:[#allocation7 + $0x1ac] sm:$0xf]
        %v780 = vld [vmem:[#allocation7 + $0x1b0] sm:$0xf]
        %v781 = vld [vmem:[#allocation7 + $0x1b4] sm:$0xf]
        %v782 = vld [vmem:[#allocation7 + $0x1b8] sm:$0xf]
        %v783 = vld [vmem:[#allocation7 + $0x1bc] sm:$0xf]
        %v784 = vld [vmem:[#allocation7 + $0x1c0] sm:$0xf]
        %v785 = vld [vmem:[#allocation7 + $0x1c4] sm:$0xf]
        %v786 = vld [vmem:[#allocation7 + $0x1c8] sm:$0xf]
        %v787 = vld [vmem:[#allocation7 + $0x1cc] sm:$0xf]
        %v788 = vld [vmem:[#allocation7 + $0x1d0] sm:$0xf]
        %v789 = vld [vmem:[#allocation7 + $0x1d4] sm:$0xf]
        %v790 = vld [vmem:[#allocation7 + $0x1d8] sm:$0xf]
        %v791 = vld [vmem:[#allocation7 + $0x1dc] sm:$0xf]
        %v792 = vld [vmem:[#allocation7 + $0x1e0] sm:$0xf]
        %v793 = vld [vmem:[#allocation7 + $0x1e4] sm:$0xf]
        %v794 = vld [vmem:[#allocation7 + $0x1e8] sm:$0xf]
        %v795 = vld [vmem:[#allocation7 + $0x1ec] sm:$0xf]
        %v796 = vld [vmem:[#allocation7 + $0x1f0] sm:$0xf]
        %v797 = vld [vmem:[#allocation7 + $0x1f4] sm:$0xf]
        %v798 = vld [vmem:[#allocation7 + $0x1f8] sm:$0xf]
        %v799 = vld [vmem:[#allocation7 + $0x1fc] sm:$0xf]
        %v800 = vld [vmem:[#allocation7 + $0x200] sm:$0xf]
        %v801 = vld [vmem:[#allocation7 + $0x204] sm:$0xf]
        %v802 = vld [vmem:[#allocation7 + $0x208] sm:$0xf]
        %v803 = vld [vmem:[#allocation7 + $0x20c] sm:$0xf]
        %v804 = vld [vmem:[#allocation7 + $0x210] sm:$0xf]
        %v805 = vld [vmem:[#allocation7 + $0x214] sm:$0xf]
        %v806 = vld [vmem:[#allocation7 + $0x218] sm:$0xf]
        %v807 = vld [vmem:[#allocation7 + $0x21c] sm:$0xf]
        %v808 = vld [vmem:[#allocation7 + $0x220] sm:$0xf]
        %v809 = vld [vmem:[#allocation7 + $0x224] sm:$0xf]
        %v810 = vld [vmem:[#allocation7 + $0x228] sm:$0xf]
        %v811 = vld [vmem:[#allocation7 + $0x22c] sm:$0xf]
        %v812 = vld [vmem:[#allocation7 + $0x230] sm:$0xf]
        %v813 = vld [vmem:[#allocation7 + $0x234] sm:$0xf]
        %v814 = vld [vmem:[#allocation7 + $0x238] sm:$0xf]
        %v815 = vld [vmem:[#allocation7 + $0x23c] sm:$0xf]
        %v816 = vld [vmem:[%s3] sm:$0x1]
        %v818 = vlaneseq
        %v819 = vshrl.u32 %v818, 7
        %v820 = vsub.s32 0, %v819
        %v821 = vrot.slane %v816, %v820
        %v967 = vunpack.c.l.b16 %v672
        %v968 = vunpack.c.l.b16 %v673
        %v969 = vunpack.c.l.b16 %v674
        %v970 = vunpack.c.l.b16 %v675
        %v971 = vunpack.c.l.b16 %v676
        %v972 = vunpack.c.l.b16 %v677
        %v973 = vunpack.c.l.b16 %v678
        %v974 = vunpack.c.l.b16 %v679
        %v975 = vunpack.c.l.b16 %v680
        %v976 = vunpack.c.l.b16 %v681
        %v977 = vunpack.c.l.b16 %v682
        %v978 = vunpack.c.l.b16 %v683
        %v979 = vunpack.c.l.b16 %v684
        %v980 = vunpack.c.l.b16 %v685
        %v981 = vunpack.c.l.b16 %v686
        %v982 = vunpack.c.l.b16 %v687
        %v983 = vunpack.c.l.b16 %v688
        %v984 = vunpack.c.l.b16 %v689
        %v985 = vunpack.c.l.b16 %v690
        %v986 = vunpack.c.l.b16 %v691
        %v987 = vunpack.c.l.b16 %v692
        %v988 = vunpack.c.l.b16 %v693
        %v989 = vunpack.c.l.b16 %v694
        %v990 = vunpack.c.l.b16 %v695
        %v991 = vunpack.c.l.b16 %v696
        %v992 = vunpack.c.l.b16 %v697
        %v993 = vunpack.c.l.b16 %v698
        %v994 = vunpack.c.l.b16 %v699
        %v995 = vunpack.c.l.b16 %v700
        %v996 = vunpack.c.l.b16 %v701
        %v997 = vunpack.c.l.b16 %v702
        %v998 = vunpack.c.l.b16 %v703
        %v999 = vunpack.c.l.b16 %v704
        %v1000 = vunpack.c.l.b16 %v705
        %v1001 = vunpack.c.l.b16 %v706
        %v1002 = vunpack.c.l.b16 %v707
        %v1003 = vunpack.c.l.b16 %v708
        %v1004 = vunpack.c.l.b16 %v709
        %v1005 = vunpack.c.l.b16 %v710
        %v1006 = vunpack.c.l.b16 %v711
        %v1007 = vunpack.c.l.b16 %v712
        %v1008 = vunpack.c.l.b16 %v713
        %v1009 = vunpack.c.l.b16 %v714
        %v1010 = vunpack.c.l.b16 %v715
        %v1011 = vunpack.c.l.b16 %v716
        %v1012 = vunpack.c.l.b16 %v717
        %v1013 = vunpack.c.l.b16 %v718
        %v1014 = vunpack.c.l.b16 %v719
        %v1015 = vunpack.c.l.b16 %v720
        %v1016 = vunpack.c.l.b16 %v721
        %v1017 = vunpack.c.l.b16 %v722
        %v1018 = vunpack.c.l.b16 %v723
        %v1019 = vunpack.c.l.b16 %v724
        %v1020 = vunpack.c.l.b16 %v725
        %v1021 = vunpack.c.l.b16 %v726
        %v1022 = vunpack.c.l.b16 %v727
        %v1023 = vunpack.c.l.b16 %v728
        %v1024 = vunpack.c.l.b16 %v729
        %v1025 = vunpack.c.l.b16 %v730
        %v1026 = vunpack.c.l.b16 %v731
        %v1027 = vunpack.c.l.b16 %v732
        %v1028 = vunpack.c.l.b16 %v733
        %v1029 = vunpack.c.l.b16 %v734
        %v1030 = vunpack.c.l.b16 %v735
        %v1031 = vunpack.c.l.b16 %v736
        %v1032 = vunpack.c.l.b16 %v737
        %v1033 = vunpack.c.l.b16 %v738
        %v1034 = vunpack.c.l.b16 %v739
        %v1035 = vunpack.c.l.b16 %v740
        %v1036 = vunpack.c.l.b16 %v741
        %v1037 = vunpack.c.l.b16 %v742
        %v1038 = vunpack.c.l.b16 %v743
        %v1039 = vunpack.c.l.b16 %v744
        %v1040 = vunpack.c.l.b16 %v745
        %v1041 = vunpack.c.l.b16 %v746
        %v1042 = vunpack.c.l.b16 %v747
        %v1043 = vunpack.c.l.b16 %v748
        %v1044 = vunpack.c.l.b16 %v749
        %v1045 = vunpack.c.l.b16 %v750
        %v1046 = vunpack.c.l.b16 %v751
        %v1047 = vunpack.c.l.b16 %v752
        %v1048 = vunpack.c.l.b16 %v753
        %v1049 = vunpack.c.l.b16 %v754
        %v1050 = vunpack.c.l.b16 %v755
        %v1051 = vunpack.c.l.b16 %v756
        %v1052 = vunpack.c.l.b16 %v757
        %v1053 = vunpack.c.l.b16 %v758
        %v1054 = vunpack.c.l.b16 %v759
        %v1055 = vunpack.c.l.b16 %v760
        %v1056 = vunpack.c.l.b16 %v761
        %v1057 = vunpack.c.l.b16 %v762
        %v1058 = vunpack.c.l.b16 %v763
        %v1059 = vunpack.c.l.b16 %v764
        %v1060 = vunpack.c.l.b16 %v765
        %v1061 = vunpack.c.l.b16 %v766
        %v1062 = vunpack.c.l.b16 %v767
        %v1063 = vunpack.c.l.b16 %v768
        %v1064 = vunpack.c.l.b16 %v769
        %v1065 = vunpack.c.l.b16 %v770
        %v1066 = vunpack.c.l.b16 %v771
        %v1067 = vunpack.c.l.b16 %v772
        %v1068 = vunpack.c.l.b16 %v773
        %v1069 = vunpack.c.l.b16 %v774
        %v1070 = vunpack.c.l.b16 %v775
        %v1071 = vunpack.c.l.b16 %v776
        %v1072 = vunpack.c.l.b16 %v777
        %v1073 = vunpack.c.l.b16 %v778
        %v1074 = vunpack.c.l.b16 %v779
        %v1075 = vunpack.c.l.b16 %v780
        %v1076 = vunpack.c.l.b16 %v781
        %v1077 = vunpack.c.l.b16 %v782
        %v1078 = vunpack.c.l.b16 %v783
        %v1079 = vunpack.c.l.b16 %v784
        %v1080 = vunpack.c.l.b16 %v785
        %v1081 = vunpack.c.l.b16 %v786
        %v1082 = vunpack.c.l.b16 %v787
        %v1083 = vunpack.c.l.b16 %v788
        %v1084 = vunpack.c.l.b16 %v789
        %v1085 = vunpack.c.l.b16 %v790
        %v1086 = vunpack.c.l.b16 %v791
        %v1087 = vunpack.c.l.b16 %v792
        %v1088 = vunpack.c.l.b16 %v793
        %v1089 = vunpack.c.l.b16 %v794
        %v1090 = vunpack.c.l.b16 %v795
        %v1091 = vunpack.c.l.b16 %v796
        %v1092 = vunpack.c.l.b16 %v797
        %v1093 = vunpack.c.l.b16 %v798
        %v1094 = vunpack.c.l.b16 %v799
        %v1095 = vunpack.c.l.b16 %v800
        %v1096 = vunpack.c.l.b16 %v801
        %v1097 = vunpack.c.l.b16 %v802
        %v1098 = vunpack.c.l.b16 %v803
        %v1099 = vunpack.c.l.b16 %v804
        %v1100 = vunpack.c.l.b16 %v805
        %v1101 = vunpack.c.l.b16 %v806
        %v1102 = vunpack.c.l.b16 %v807
        %v1103 = vunpack.c.l.b16 %v808
        %v1104 = vunpack.c.l.b16 %v809
        %v1105 = vunpack.c.l.b16 %v810
        %v1106 = vunpack.c.l.b16 %v811
        %v1107 = vunpack.c.l.b16 %v812
        %v1108 = vunpack.c.l.b16 %v813
        %v1109 = vunpack.c.l.b16 %v814
        %v1110 = vunpack.c.l.b16 %v815
        %v1111 = vpack.c.b16 %v968, %v967
        %v1112 = vpack.c.b16 %v970, %v969
        %v1113 = vpack.c.b16 %v972, %v971
        %v1114 = vpack.c.b16 %v974, %v973
        %v1115 = vpack.c.b16 %v976, %v975
        %v1116 = vpack.c.b16 %v978, %v977
        %v1117 = vpack.c.b16 %v980, %v979
        %v1118 = vpack.c.b16 %v982, %v981
        %v1119 = vpack.c.b16 %v984, %v983
        %v1120 = vpack.c.b16 %v986, %v985
        %v1121 = vpack.c.b16 %v988, %v987
        %v1122 = vpack.c.b16 %v990, %v989
        %v1123 = vpack.c.b16 %v992, %v991
        %v1124 = vpack.c.b16 %v994, %v993
        %v1125 = vpack.c.b16 %v996, %v995
        %v1126 = vpack.c.b16 %v998, %v997
        %v1127 = vpack.c.b16 %v1000, %v999
        %v1128 = vpack.c.b16 %v1002, %v1001
        %v1129 = vpack.c.b16 %v1004, %v1003
        %v1130 = vpack.c.b16 %v1006, %v1005
        %v1131 = vpack.c.b16 %v1008, %v1007
        %v1132 = vpack.c.b16 %v1010, %v1009
        %v1133 = vpack.c.b16 %v1012, %v1011
        %v1134 = vpack.c.b16 %v1014, %v1013
        %v1135 = vpack.c.b16 %v1016, %v1015
        %v1136 = vpack.c.b16 %v1018, %v1017
        %v1137 = vpack.c.b16 %v1020, %v1019
        %v1138 = vpack.c.b16 %v1022, %v1021
        %v1139 = vpack.c.b16 %v1024, %v1023
        %v1140 = vpack.c.b16 %v1026, %v1025
        %v1141 = vpack.c.b16 %v1028, %v1027
        %v1142 = vpack.c.b16 %v1030, %v1029
        %v1143 = vpack.c.b16 %v1032, %v1031
        %v1144 = vpack.c.b16 %v1034, %v1033
        %v1145 = vpack.c.b16 %v1036, %v1035
        %v1146 = vpack.c.b16 %v1038, %v1037
        %v1147 = vpack.c.b16 %v1040, %v1039
        %v1148 = vpack.c.b16 %v1042, %v1041
        %v1149 = vpack.c.b16 %v1044, %v1043
        %v1150 = vpack.c.b16 %v1046, %v1045
        %v1151 = vpack.c.b16 %v1048, %v1047
        %v1152 = vpack.c.b16 %v1050, %v1049
        %v1153 = vpack.c.b16 %v1052, %v1051
        %v1154 = vpack.c.b16 %v1054, %v1053
        %v1155 = vpack.c.b16 %v1056, %v1055
        %v1156 = vpack.c.b16 %v1058, %v1057
        %v1157 = vpack.c.b16 %v1060, %v1059
        %v1158 = vpack.c.b16 %v1062, %v1061
        %v1159 = vpack.c.b16 %v1064, %v1063
        %v1160 = vpack.c.b16 %v1066, %v1065
        %v1161 = vpack.c.b16 %v1068, %v1067
        %v1162 = vpack.c.b16 %v1070, %v1069
        %v1163 = vpack.c.b16 %v1072, %v1071
        %v1164 = vpack.c.b16 %v1074, %v1073
        %v1165 = vpack.c.b16 %v1076, %v1075
        %v1166 = vpack.c.b16 %v1078, %v1077
        %v1167 = vpack.c.b16 %v1080, %v1079
        %v1168 = vpack.c.b16 %v1082, %v1081
        %v1169 = vpack.c.b16 %v1084, %v1083
        %v1170 = vpack.c.b16 %v1086, %v1085
        %v1171 = vpack.c.b16 %v1088, %v1087
        %v1172 = vpack.c.b16 %v1090, %v1089
        %v1173 = vpack.c.b16 %v1092, %v1091
        %v1174 = vpack.c.b16 %v1094, %v1093
        %v1175 = vpack.c.b16 %v1096, %v1095
        %v1176 = vpack.c.b16 %v1098, %v1097
        %v1177 = vpack.c.b16 %v1100, %v1099
        %v1178 = vpack.c.b16 %v1102, %v1101
        %v1179 = vpack.c.b16 %v1104, %v1103
        %v1180 = vpack.c.b16 %v1106, %v1105
        %v1181 = vpack.c.b16 %v1108, %v1107
        %v1182 = vpack.c.b16 %v1110, %v1109
        %1255 = vmatprep.subr.bf16.mxu0 0
        %1256 = vmatpush1.bf16.msra.mxu0 %v1118
        %1257 = vmatprep.subr.bf16.mxu0 0
        %1258 = vmatpush1.bf16.msra.mxu0 %v1117
        %1259 = vmatprep.subr.bf16.mxu0 0
        %1260 = vmatpush1.bf16.msra.mxu0 %v1116
        %1261 = vmatprep.subr.bf16.mxu0 0
        %1262 = vmatpush1.bf16.msra.mxu0 %v1115
        %1263 = vmatprep.subr.bf16.mxu0 0
        %1264 = vmatpush1.bf16.msra.mxu0 %v1114
        %1265 = vmatprep.subr.bf16.mxu0 0
        %1266 = vmatpush1.bf16.msra.mxu0 %v1113
        %1267 = vmatprep.subr.bf16.mxu0 0
        %1268 = vmatpush1.bf16.msra.mxu0 %v1112
        %1269 = vmatprep.subr.bf16.mxu0 0
        %1270 = vmatpush1.bf16.msra.mxu0 %v1111
        %1271 = vmatprep.subr.bf16.mxu0 0
        %1272 = vmatpush2.bf16.msra.mxu0 %v1126
        %1273 = vmatprep.subr.bf16.mxu0 0
        %1274 = vmatpush2.bf16.msra.mxu0 %v1125
        %1275 = vmatprep.subr.bf16.mxu0 0
        %1276 = vmatpush2.bf16.msra.mxu0 %v1124
        %1277 = vmatprep.subr.bf16.mxu0 0
        %1278 = vmatpush2.bf16.msra.mxu0 %v1123
        %1279 = vmatprep.subr.bf16.mxu0 0
        %1280 = vmatpush2.bf16.msra.mxu0 %v1122
        %1281 = vmatprep.subr.bf16.mxu0 0
        %1282 = vmatpush2.bf16.msra.mxu0 %v1121
        %1283 = vmatprep.subr.bf16.mxu0 0
        %1284 = vmatpush2.bf16.msra.mxu0 %v1120
        %1285 = vmatprep.subr.bf16.mxu0 0
        %1286 = vmatpush2.bf16.msra.mxu0 %v1119
        %1287 = vmatprep.mubr.bf16.mxu0 %v530
        %1288 = vmatmul.mubr.bf16.gmra.mxu0 %v502
        %v1289 = vpop.f32.mrf.mxu0
        %v1290 = vadd.f32 %v821, %v1289
        %v1291 = vpop.f32.mrf.mxu0
        %v1292 = vpop.f32.mrf.mxu0
        %v1293 = vadd.f32 %v821, %v1292
        %v1294 = vpop.f32.mrf.mxu0
        %1295 = vmatprep.mubr.bf16.mxu0 %v542
        %1296 = vmatmul.mubr.bf16.gmra.mxu0 %v503
        %v1297 = vpop.f32.mrf.mxu0
        %v1298 = vadd.f32 %v821, %v1297
        %v1299 = vpop.f32.mrf.mxu0
        %v1300 = vpop.f32.mrf.mxu0
        %v1301 = vadd.f32 %v821, %v1300
        %v1302 = vpop.f32.mrf.mxu0
        %1303 = vmatprep.mubr.bf16.mxu0 %v554
        %1304 = vmatmul.mubr.bf16.gmra.mxu0 %v504
        %v1305 = vpop.f32.mrf.mxu0
        %v1306 = vadd.f32 %v821, %v1305
        %v1307 = vpop.f32.mrf.mxu0
        %v1308 = vpop.f32.mrf.mxu0
        %v1309 = vadd.f32 %v821, %v1308
        %v1310 = vpop.f32.mrf.mxu0
        %1311 = vmatprep.mubr.bf16.mxu0 %v566
        %1312 = vmatmul.mubr.bf16.gmra.mxu0 %v505
        %v1313 = vpop.f32.mrf.mxu0
        %v1314 = vadd.f32 %v821, %v1313
        %v1315 = vpop.f32.mrf.mxu0
        %v1316 = vpop.f32.mrf.mxu0
        %v1317 = vadd.f32 %v821, %v1316
        %v1318 = vpop.f32.mrf.mxu0
        %1319 = vmatprep.mubr.bf16.mxu0 %v578
        %1320 = vmatmul.mubr.bf16.gmra.mxu0 %v506
        %v1321 = vpop.f32.mrf.mxu0
        %v1322 = vadd.f32 %v821, %v1321
        %v1323 = vpop.f32.mrf.mxu0
        %v1324 = vpop.f32.mrf.mxu0
        %v1325 = vadd.f32 %v821, %v1324
        %v1326 = vpop.f32.mrf.mxu0
        %1327 = vmatprep.mubr.bf16.mxu0 %v590
        %1328 = vmatmul.mubr.bf16.gmra.mxu0 %v507
        %v1329 = vpop.f32.mrf.mxu0
        %v1330 = vadd.f32 %v821, %v1329
        %v1331 = vpop.f32.mrf.mxu0
        %v1332 = vpop.f32.mrf.mxu0
        %v1333 = vadd.f32 %v821, %v1332
        %v1334 = vpop.f32.mrf.mxu0
        %1335 = vdwg.mxu0
        %1336 = vmatprep.subr.bf16.mxu0 0
        %1337 = vmatpush1.bf16.msra.mxu0 %v1134
        %1338 = vmatprep.subr.bf16.mxu0 0
        %1339 = vmatpush1.bf16.msra.mxu0 %v1133
        %1340 = vmatprep.subr.bf16.mxu0 0
        %1341 = vmatpush1.bf16.msra.mxu0 %v1132
        %1342 = vmatprep.subr.bf16.mxu0 0
        %1343 = vmatpush1.bf16.msra.mxu0 %v1131
        %1344 = vmatprep.subr.bf16.mxu0 0
        %1345 = vmatpush1.bf16.msra.mxu0 %v1130
        %1346 = vmatprep.subr.bf16.mxu0 0
        %1347 = vmatpush1.bf16.msra.mxu0 %v1129
        %1348 = vmatprep.subr.bf16.mxu0 0
        %1349 = vmatpush1.bf16.msra.mxu0 %v1128
        %1350 = vmatprep.subr.bf16.mxu0 0
        %1351 = vmatpush1.bf16.msra.mxu0 %v1127
        %1352 = vmatprep.subr.bf16.mxu0 0
        %1353 = vmatpush2.bf16.msra.mxu0 %v1142
        %1354 = vmatprep.subr.bf16.mxu0 0
        %1355 = vmatpush2.bf16.msra.mxu0 %v1141
        %1356 = vmatprep.subr.bf16.mxu0 0
        %1357 = vmatpush2.bf16.msra.mxu0 %v1140
        %1358 = vmatprep.subr.bf16.mxu0 0
        %1359 = vmatpush2.bf16.msra.mxu0 %v1139
        %1360 = vmatprep.subr.bf16.mxu0 0
        %1361 = vmatpush2.bf16.msra.mxu0 %v1138
        %1362 = vmatprep.subr.bf16.mxu0 0
        %1363 = vmatpush2.bf16.msra.mxu0 %v1137
        %1364 = vmatprep.subr.bf16.mxu0 0
        %1365 = vmatpush2.bf16.msra.mxu0 %v1136
        %1366 = vmatprep.subr.bf16.mxu0 0
        %1367 = vmatpush2.bf16.msra.mxu0 %v1135
        %1368 = vmatprep.mubr.bf16.mxu0 %v503
        %1369 = vmatmul.mubr.bf16.gmra.mxu0 %v612
        %v1370 = vpop.f32.mrf.mxu0
        %v1371 = vadd.f32 %v1290, %v1370
        %v1372 = vpop.f32.mrf.mxu0
        %v1373 = vpop.f32.mrf.mxu0
        %v1374 = vadd.f32 %v1293, %v1373
        %v1375 = vpop.f32.mrf.mxu0
        %1376 = vmatprep.mubr.bf16.mxu0 %v504
        %1377 = vmatmul.mubr.bf16.gmra.mxu0 %v615
        %v1378 = vpop.f32.mrf.mxu0
        %v1379 = vadd.f32 %v1298, %v1378
        %v1380 = vpop.f32.mrf.mxu0
        %v1381 = vpop.f32.mrf.mxu0
        %v1382 = vadd.f32 %v1301, %v1381
        %v1383 = vpop.f32.mrf.mxu0
        %1384 = vmatprep.mubr.bf16.mxu0 %v505
        %1385 = vmatmul.mubr.bf16.gmra.mxu0 %v618
        %v1386 = vpop.f32.mrf.mxu0
        %v1387 = vadd.f32 %v1306, %v1386
        %v1388 = vpop.f32.mrf.mxu0
        %v1389 = vpop.f32.mrf.mxu0
        %v1390 = vadd.f32 %v1309, %v1389
        %v1391 = vpop.f32.mrf.mxu0
        %1392 = vmatprep.mubr.bf16.mxu0 %v506
        %1393 = vmatmul.mubr.bf16.gmra.mxu0 %v621
        %v1394 = vpop.f32.mrf.mxu0
        %v1395 = vadd.f32 %v1314, %v1394
        %v1396 = vpop.f32.mrf.mxu0
        %v1397 = vpop.f32.mrf.mxu0
        %v1398 = vadd.f32 %v1317, %v1397
        %v1399 = vpop.f32.mrf.mxu0
        %1400 = vmatprep.mubr.bf16.mxu0 %v507
        %1401 = vmatmul.mubr.bf16.gmra.mxu0 %v624
        %v1402 = vpop.f32.mrf.mxu0
        %v1403 = vadd.f32 %v1322, %v1402
        %v1404 = vpop.f32.mrf.mxu0
        %v1405 = vpop.f32.mrf.mxu0
        %v1406 = vadd.f32 %v1325, %v1405
        %v1407 = vpop.f32.mrf.mxu0
        %1408 = vmatprep.mubr.bf16.mxu0 %v508
        %1409 = vmatmul.mubr.bf16.gmra.mxu0 %v627
        %v1410 = vpop.f32.mrf.mxu0
        %v1411 = vadd.f32 %v1330, %v1410
        %v1412 = vpop.f32.mrf.mxu0
        %v1413 = vpop.f32.mrf.mxu0
        %v1414 = vadd.f32 %v1333, %v1413
        %v1415 = vpop.f32.mrf.mxu0
        %1416 = vdwg.mxu0
        %1417 = vmatprep.subr.bf16.mxu0 0
        %1418 = vmatpush1.bf16.msra.mxu0 %v1150
        %1419 = vmatprep.subr.bf16.mxu0 0
        %1420 = vmatpush1.bf16.msra.mxu0 %v1149
        %1421 = vmatprep.subr.bf16.mxu0 0
        %1422 = vmatpush1.bf16.msra.mxu0 %v1148
        %1423 = vmatprep.subr.bf16.mxu0 0
        %1424 = vmatpush1.bf16.msra.mxu0 %v1147
        %1425 = vmatprep.subr.bf16.mxu0 0
        %1426 = vmatpush1.bf16.msra.mxu0 %v1146
        %1427 = vmatprep.subr.bf16.mxu0 0
        %1428 = vmatpush1.bf16.msra.mxu0 %v1145
        %1429 = vmatprep.subr.bf16.mxu0 0
        %1430 = vmatpush1.bf16.msra.mxu0 %v1144
        %1431 = vmatprep.subr.bf16.mxu0 0
        %1432 = vmatpush1.bf16.msra.mxu0 %v1143
        %1433 = vmatprep.subr.bf16.mxu0 0
        %1434 = vmatpush2.bf16.msra.mxu0 %v1158
        %1435 = vmatprep.subr.bf16.mxu0 0
        %1436 = vmatpush2.bf16.msra.mxu0 %v1157
        %1437 = vmatprep.subr.bf16.mxu0 0
        %1438 = vmatpush2.bf16.msra.mxu0 %v1156
        %1439 = vmatprep.subr.bf16.mxu0 0
        %1440 = vmatpush2.bf16.msra.mxu0 %v1155
        %1441 = vmatprep.subr.bf16.mxu0 0
        %1442 = vmatpush2.bf16.msra.mxu0 %v1154
        %1443 = vmatprep.subr.bf16.mxu0 0
        %1444 = vmatpush2.bf16.msra.mxu0 %v1153
        %1445 = vmatprep.subr.bf16.mxu0 0
        %1446 = vmatpush2.bf16.msra.mxu0 %v1152
        %1447 = vmatprep.subr.bf16.mxu0 0
        %1448 = vmatpush2.bf16.msra.mxu0 %v1151
        %1449 = vmatprep.mubr.bf16.mxu0 %v615
        %1450 = vmatmul.mubr.bf16.gmra.mxu0 %v542
        %v1451 = vpop.f32.mrf.mxu0
        %v1452 = vadd.f32 %v1371, %v1451
        %v1453 = vpop.f32.mrf.mxu0
        %v1454 = vpop.f32.mrf.mxu0
        %v1455 = vadd.f32 %v1374, %v1454
        %v1456 = vpop.f32.mrf.mxu0
        %1457 = vmatprep.mubr.bf16.mxu0 %v618
        %1458 = vmatmul.mubr.bf16.gmra.mxu0 %v554
        %v1459 = vpop.f32.mrf.mxu0
        %v1460 = vadd.f32 %v1379, %v1459
        %v1461 = vpop.f32.mrf.mxu0
        %v1462 = vpop.f32.mrf.mxu0
        %v1463 = vadd.f32 %v1382, %v1462
        %v1464 = vpop.f32.mrf.mxu0
        %1465 = vmatprep.mubr.bf16.mxu0 %v621
        %1466 = vmatmul.mubr.bf16.gmra.mxu0 %v566
        %v1467 = vpop.f32.mrf.mxu0
        %v1468 = vadd.f32 %v1387, %v1467
        %v1469 = vpop.f32.mrf.mxu0
        %v1470 = vpop.f32.mrf.mxu0
        %v1471 = vadd.f32 %v1390, %v1470
        %v1472 = vpop.f32.mrf.mxu0
        %1473 = vmatprep.mubr.bf16.mxu0 %v624
        %1474 = vmatmul.mubr.bf16.gmra.mxu0 %v578
        %v1475 = vpop.f32.mrf.mxu0
        %v1476 = vadd.f32 %v1395, %v1475
        %v1477 = vpop.f32.mrf.mxu0
        %v1478 = vpop.f32.mrf.mxu0
        %v1479 = vadd.f32 %v1398, %v1478
        %v1480 = vpop.f32.mrf.mxu0
        %1481 = vmatprep.mubr.bf16.mxu0 %v627
        %1482 = vmatmul.mubr.bf16.gmra.mxu0 %v590
        %v1483 = vpop.f32.mrf.mxu0
        %v1484 = vadd.f32 %v1403, %v1483
        %v1485 = vpop.f32.mrf.mxu0
        %v1486 = vpop.f32.mrf.mxu0
        %v1487 = vadd.f32 %v1406, %v1486
        %v1488 = vpop.f32.mrf.mxu0
        %1489 = vmatprep.mubr.bf16.mxu0 %v651
        %1490 = vmatmul.mubr.bf16.gmra.mxu0 %v645
        %v1491 = vpop.f32.mrf.mxu0
        %v1492 = vadd.f32 %v1411, %v1491
        %v1493 = vpop.f32.mrf.mxu0
        %v1494 = vpop.f32.mrf.mxu0
        %v1495 = vadd.f32 %v1414, %v1494
        %v1496 = vpop.f32.mrf.mxu0
        %1497 = vdwg.mxu0
        %1498 = vmatprep.subr.bf16.mxu0 0
        %1499 = vmatpush1.bf16.msra.mxu0 %v1166
        %1500 = vmatprep.subr.bf16.mxu0 0
        %1501 = vmatpush1.bf16.msra.mxu0 %v1165
        %1502 = vmatprep.subr.bf16.mxu0 0
        %1503 = vmatpush1.bf16.msra.mxu0 %v1164
        %1504 = vmatprep.subr.bf16.mxu0 0
        %1505 = vmatpush1.bf16.msra.mxu0 %v1163
        %1506 = vmatprep.subr.bf16.mxu0 0
        %1507 = vmatpush1.bf16.msra.mxu0 %v1162
        %1508 = vmatprep.subr.bf16.mxu0 0
        %1509 = vmatpush1.bf16.msra.mxu0 %v1161
        %1510 = vmatprep.subr.bf16.mxu0 0
        %1511 = vmatpush1.bf16.msra.mxu0 %v1160
        %1512 = vmatprep.subr.bf16.mxu0 0
        %1513 = vmatpush1.bf16.msra.mxu0 %v1159
        %1514 = vmatprep.subr.bf16.mxu0 0
        %1515 = vmatpush2.bf16.msra.mxu0 %v1174
        %1516 = vmatprep.subr.bf16.mxu0 0
        %1517 = vmatpush2.bf16.msra.mxu0 %v1173
        %1518 = vmatprep.subr.bf16.mxu0 0
        %1519 = vmatpush2.bf16.msra.mxu0 %v1172
        %1520 = vmatprep.subr.bf16.mxu0 0
        %1521 = vmatpush2.bf16.msra.mxu0 %v1171
        %1522 = vmatprep.subr.bf16.mxu0 0
        %1523 = vmatpush2.bf16.msra.mxu0 %v1170
        %1524 = vmatprep.subr.bf16.mxu0 0
        %1525 = vmatpush2.bf16.msra.mxu0 %v1169
        %1526 = vmatprep.subr.bf16.mxu0 0
        %1527 = vmatpush2.bf16.msra.mxu0 %v1168
        %1528 = vmatprep.subr.bf16.mxu0 0
        %1529 = vmatpush2.bf16.msra.mxu0 %v1167
        %1530 = vmatprep.mubr.bf16.mxu0 %v554
        %1531 = vmatmul.mubr.bf16.gmra.mxu0 %v504
        %v1532 = vpop.f32.mrf.mxu0
        %v1533 = vadd.f32 %v1452, %v1532
        %v1534 = vpop.f32.mrf.mxu0
        %v1535 = vpop.f32.mrf.mxu0
        %v1536 = vadd.f32 %v1455, %v1535
        %v1537 = vpop.f32.mrf.mxu0
        %1538 = vmatprep.mubr.bf16.mxu0 %v566
        %1539 = vmatmul.mubr.bf16.gmra.mxu0 %v505
        %v1540 = vpop.f32.mrf.mxu0
        %v1541 = vadd.f32 %v1460, %v1540
        %v1542 = vpop.f32.mrf.mxu0
        %v1543 = vpop.f32.mrf.mxu0
        %v1544 = vadd.f32 %v1463, %v1543
        %v1545 = vpop.f32.mrf.mxu0
        %1546 = vmatprep.mubr.bf16.mxu0 %v578
        %1547 = vmatmul.mubr.bf16.gmra.mxu0 %v506
        %v1548 = vpop.f32.mrf.mxu0
        %v1549 = vadd.f32 %v1468, %v1548
        %v1550 = vpop.f32.mrf.mxu0
        %v1551 = vpop.f32.mrf.mxu0
        %v1552 = vadd.f32 %v1471, %v1551
        %v1553 = vpop.f32.mrf.mxu0
        %1554 = vmatprep.mubr.bf16.mxu0 %v590
        %1555 = vmatmul.mubr.bf16.gmra.mxu0 %v507
        %v1556 = vpop.f32.mrf.mxu0
        %v1557 = vadd.f32 %v1476, %v1556
        %v1558 = vpop.f32.mrf.mxu0
        %v1559 = vpop.f32.mrf.mxu0
        %v1560 = vadd.f32 %v1479, %v1559
        %v1561 = vpop.f32.mrf.mxu0
        %1562 = vmatprep.mubr.bf16.mxu0 %v645
        %1563 = vmatmul.mubr.bf16.gmra.mxu0 %v508
        %v1564 = vpop.f32.mrf.mxu0
        %v1565 = vadd.f32 %v1484, %v1564
        %v1566 = vpop.f32.mrf.mxu0
        %v1567 = vpop.f32.mrf.mxu0
        %v1568 = vadd.f32 %v1487, %v1567
        %v1569 = vpop.f32.mrf.mxu0
        %1570 = vmatprep.mubr.bf16.mxu0 %v664
        %1571 = vmatmul.mubr.bf16.gmra.mxu0 %v509
        %v1572 = vpop.f32.mrf.mxu0
        %v1573 = vadd.f32 %v1492, %v1572
        %v1574 = vpop.f32.mrf.mxu0
        %v1575 = vpop.f32.mrf.mxu0
        %v1576 = vadd.f32 %v1495, %v1575
        %v1577 = vpop.f32.mrf.mxu0
        %1578 = vdwg.mxu0
        %1579 = vmatprep.subr.bf16.mxu0 0
        %1580 = vmatpush1.bf16.msra.mxu0 %v1182
        %1581 = vmatprep.subr.bf16.mxu0 0
        %1582 = vmatpush1.bf16.msra.mxu0 %v1181
        %1583 = vmatprep.subr.bf16.mxu0 0
        %1584 = vmatpush1.bf16.msra.mxu0 %v1180
        %1585 = vmatprep.subr.bf16.mxu0 0
        %1586 = vmatpush1.bf16.msra.mxu0 %v1179
        %1587 = vmatprep.subr.bf16.mxu0 0
        %1588 = vmatpush1.bf16.msra.mxu0 %v1178
        %1589 = vmatprep.subr.bf16.mxu0 0
        %1590 = vmatpush1.bf16.msra.mxu0 %v1177
        %1591 = vmatprep.subr.bf16.mxu0 0
        %1592 = vmatpush1.bf16.msra.mxu0 %v1176
        %1593 = vmatprep.subr.bf16.mxu0 0
        %1594 = vmatpush1.bf16.msra.mxu0 %v1175
        %1595 = vmatprep.subr.bf16.mxu0 0
        %1596 = vmatpush2.bf16.msra.mxu0 0
        %1597 = vmatprep.subr.bf16.mxu0 0
        %1598 = vmatpush2.bf16.msra.mxu0 0
        %1599 = vmatprep.subr.bf16.mxu0 0
        %1600 = vmatpush2.bf16.msra.mxu0 0
        %1601 = vmatprep.subr.bf16.mxu0 0
        %1602 = vmatpush2.bf16.msra.mxu0 0
        %1603 = vmatprep.subr.bf16.mxu0 0
        %1604 = vmatpush2.bf16.msra.mxu0 0
        %1605 = vmatprep.subr.bf16.mxu0 0
        %1606 = vmatpush2.bf16.msra.mxu0 0
        %1607 = vmatprep.subr.bf16.mxu0 0
        %1608 = vmatpush2.bf16.msra.mxu0 0
        %1609 = vmatprep.subr.bf16.mxu0 0
        %1610 = vmatpush2.bf16.msra.mxu0 0
        %1611 = vmatprep.mubr.bf16.mxu0 0
        %1612 = vmatmul.mubr.bf16.gmra.mxu0 %v618
        %v1613 = vpop.f32.mrf.mxu0
        %v1614 = vadd.f32 %v1533, %v1613
        %v1615 = vpop.f32.mrf.mxu0
        %v1616 = vpop.f32.mrf.mxu0
        %v1617 = vadd.f32 %v1536, %v1616
        %v1618 = vpop.f32.mrf.mxu0
        %1619 = vmatprep.mubr.bf16.mxu0 0
        %1620 = vmatmul.mubr.bf16.gmra.mxu0 %v621
        %v1621 = vpop.f32.mrf.mxu0
        %v1622 = vadd.f32 %v1541, %v1621
        %v1623 = vpop.f32.mrf.mxu0
        %v1624 = vpop.f32.mrf.mxu0
        %v1625 = vadd.f32 %v1544, %v1624
        %v1626 = vpop.f32.mrf.mxu0
        %1627 = vmatprep.mubr.bf16.mxu0 0
        %1628 = vmatmul.mubr.bf16.gmra.mxu0 %v624
        %v1629 = vpop.f32.mrf.mxu0
        %v1630 = vadd.f32 %v1549, %v1629
        %v1631 = vpop.f32.mrf.mxu0
        %v1632 = vpop.f32.mrf.mxu0
        %v1633 = vadd.f32 %v1552, %v1632
        %v1634 = vpop.f32.mrf.mxu0
        %1635 = vmatprep.mubr.bf16.mxu0 0
        %1636 = vmatmul.mubr.bf16.gmra.mxu0 %v627
        %v1637 = vpop.f32.mrf.mxu0
        %v1638 = vadd.f32 %v1557, %v1637
        %v1639 = vpop.f32.mrf.mxu0
        %v1640 = vpop.f32.mrf.mxu0
        %v1641 = vadd.f32 %v1560, %v1640
        %v1642 = vpop.f32.mrf.mxu0
        %1643 = vmatprep.mubr.bf16.mxu0 0
        %1644 = vmatmul.mubr.bf16.gmra.mxu0 %v651
        %v1645 = vpop.f32.mrf.mxu0
        %v1646 = vadd.f32 %v1565, %v1645
        %v1647 = vpop.f32.mrf.mxu0
        %v1648 = vpop.f32.mrf.mxu0
        %v1649 = vadd.f32 %v1568, %v1648
        %v1650 = vpop.f32.mrf.mxu0
        %1651 = vmatprep.mubr.bf16.mxu0 0
        %1652 = vmatmul.mubr.bf16.gmra.mxu0 %v670
        %v1653 = vpop.f32.mrf.mxu0
        %v1654 = vadd.f32 %v1573, %v1653
        %v1655 = vpop.f32.mrf.mxu0
        %v1656 = vpop.f32.mrf.mxu0
        %v1657 = vadd.f32 %v1576, %v1656
        %v1658 = vpop.f32.mrf.mxu0
        %1659 = vdwg.mxu0
        %v1660 = vmax.f32 %v1614, 0.0
        %v1661 = vmax.f32 %v1617, 0.0
        %v1662 = vmax.f32 %v1622, 0.0
        %v1663 = vmax.f32 %v1625, 0.0
        %v1664 = vmax.f32 %v1630, 0.0
        %v1665 = vmax.f32 %v1633, 0.0
        %v1666 = vmax.f32 %v1638, 0.0
        %v1667 = vmax.f32 %v1641, 0.0
        %v1668 = vmax.f32 %v1646, 0.0
        %v1669 = vmax.f32 %v1649, 0.0
        %v1670 = vmax.f32 %v1654, 0.0
        %v1671 = vmax.f32 %v1657, 0.0
        %p1672 = scmp.ne.s32.totalorder %s32, 0
        %s1673 = scalar_select %p1672, 1, 0
        %v1674 = vstv %s1673
        %vm1675 = vcmp.eq.s32.totalorder %v1674, 1
        %p1676 = scmp.ne.s32.totalorder %s32, 3
        %s1677 = scalar_select %p1676, 1, 0
        %v1678 = vstv %s1677
        %vm1679 = vcmp.eq.s32.totalorder %v1678, 1
        %v1680 = vsel %vm1675, 1, 0
        %v1681 = vsel %vm1679, 1, 0
        %vm1682 = vcmp.eq.s32.totalorder %v1680, 1
        %vm1683 = vcmp.eq.s32.totalorder %v1681, 1
        %v1684 = vsel %vm1682, %v1660, 0.0
        %v1685 = vsel %vm1682, %v1661, 0.0
        %v1686 = vsel 1, %v1662, 0.0
        %v1687 = vsel 1, %v1663, 0.0
        %v1688 = vsel 1, %v1664, 0.0
        %v1689 = vsel 1, %v1665, 0.0
        %v1690 = vsel 1, %v1666, 0.0
        %v1691 = vsel 1, %v1667, 0.0
        %v1692 = vsel 1, %v1668, 0.0
        %v1693 = vsel 1, %v1669, 0.0
        %v1694 = vsel %vm1683, %v1670, 0.0
        %v1695 = vsel %vm1683, %v1671, 0.0
        %v1696 = vpack.c.bf16 %v1685, %v1684
        %v1697 = vpack.c.bf16 %v1687, %v1686
        %v1698 = vpack.c.bf16 %v1689, %v1688
        %v1699 = vpack.c.bf16 %v1691, %v1690
        %v1700 = vpack.c.bf16 %v1693, %v1692
        %v1701 = vpack.c.bf16 %v1695, %v1694
        %v1703 = vshrl.u32 %v1696, 16
        %v1705 = vrot.slane %v1703, 7
        %v1706 = vshll.u32 %v1696, 16
        %v1708 = vor.u32 %v1705, %v1706
        %v1710 = vshrl.u32 %v1697, 16
        %v1712 = vrot.slane %v1710, 7
        %v1713 = vshll.u32 %v1697, 16
        %v1715 = vor.u32 %v1712, %v1713
        %v1717 = vshrl.u32 %v1698, 16
        %v1719 = vrot.slane %v1717, 7
        %v1720 = vshll.u32 %v1698, 16
        %v1722 = vor.u32 %v1719, %v1720
        %v1724 = vshrl.u32 %v1699, 16
        %v1726 = vrot.slane %v1724, 7
        %v1727 = vshll.u32 %v1699, 16
        %v1729 = vor.u32 %v1726, %v1727
        %v1731 = vshrl.u32 %v1700, 16
        %v1733 = vrot.slane %v1731, 7
        %v1734 = vshll.u32 %v1700, 16
        %v1736 = vor.u32 %v1733, %v1734
        %v1738 = vshrl.u32 %v1701, 16
        %v1740 = vrot.slane %v1738, 7
        %v1741 = vshll.u32 %v1701, 16
        %v1743 = vor.u32 %v1740, %v1741
        %v1756 = vsel %vm501, 0, %v1708
        %v1757 = vsel %vm501, 0, %v1715
        %v1758 = vsel %vm501, 0, %v1722
        %v1759 = vsel %vm501, 0, %v1729
        %v1760 = vsel %vm501, 0, %v1736
        %v1761 = vsel %vm501, 0, %v1743
        %v1762 = vsel %vm501, %v1705, 0
        %v1763 = vsel %vm501, %v1712, 0
        %v1764 = vsel %vm501, %v1719, 0
        %v1765 = vsel %vm501, %v1726, 0
        %v1766 = vsel %vm501, %v1733, 0
        %v1767 = vsel %vm501, %v1740, 0
        %v1769 = vshrl.u32 %v1756, 16
        %v1771 = vshll.u32 %v1756, 16
        %v1773 = vrot.slane %v1771, 1
        %v1774 = vor.u32 %v1769, %v1773
        %v1776 = vshll.u32 %v1762, 16
        %v1778 = vrot.slane %v1776, 1
        %v1779 = vsel %vm518, %v1774, %v1778
        %v1781 = vshrl.u32 %v1757, 16
        %v1783 = vshll.u32 %v1757, 16
        %v1785 = vrot.slane %v1783, 1
        %v1786 = vor.u32 %v1781, %v1785
        %v1788 = vshll.u32 %v1763, 16
        %v1790 = vrot.slane %v1788, 1
        %v1791 = vsel %vm518, %v1786, %v1790
        %v1793 = vshrl.u32 %v1758, 16
        %v1795 = vshll.u32 %v1758, 16
        %v1797 = vrot.slane %v1795, 1
        %v1798 = vor.u32 %v1793, %v1797
        %v1800 = vshll.u32 %v1764, 16
        %v1802 = vrot.slane %v1800, 1
        %v1803 = vsel %vm518, %v1798, %v1802
        %v1805 = vshrl.u32 %v1759, 16
        %v1807 = vshll.u32 %v1759, 16
        %v1809 = vrot.slane %v1807, 1
        %v1810 = vor.u32 %v1805, %v1809
        %v1812 = vshll.u32 %v1765, 16
        %v1814 = vrot.slane %v1812, 1
        %v1815 = vsel %vm518, %v1810, %v1814
        %v1828 = vrot.slane %v1756, 1
        %v1829 = vrot.slane %v1762, 1
        %v1830 = vsel %vm609, %v1828, %v1829
        %v1831 = vrot.slane %v1757, 1
        %v1832 = vrot.slane %v1763, 1
        %v1833 = vsel %vm609, %v1831, %v1832
        %v1834 = vrot.slane %v1758, 1
        %v1835 = vrot.slane %v1764, 1
        %v1836 = vsel %vm609, %v1834, %v1835
        %v1837 = vrot.slane %v1759, 1
        %v1838 = vrot.slane %v1765, 1
        %v1839 = vsel %vm609, %v1837, %v1838
        %v1845 = vshrl.u32 %v1760, 16
        %v1847 = vshll.u32 %v1760, 16
        %v1849 = vrot.slane %v1847, 1
        %v1850 = vor.u32 %v1845, %v1849
        %v1852 = vshll.u32 %v1766, 16
        %v1854 = vrot.slane %v1852, 1
        %v1855 = vsel %vm518, %v1850, %v1854
        %v1859 = vrot.slane %v1760, 1
        %v1860 = vrot.slane %v1766, 1
        %v1861 = vsel %vm609, %v1859, %v1860
        %v1864 = vshrl.u32 %v1761, 16
        %v1866 = vshll.u32 %v1761, 16
        %v1868 = vrot.slane %v1866, 1
        %v1869 = vor.u32 %v1864, %v1868
        %v1871 = vshll.u32 %v1767, 16
        %v1873 = vrot.slane %v1871, 1
        %v1874 = vsel %vm518, %v1869, %v1873
        %v1878 = vrot.slane %v1761, 1
        %v1879 = vrot.slane %v1767, 1
        %v1880 = vsel %vm609, %v1878, %v1879
        %v1882 = vld [vmem:[#allocation8] sm:$0xf]
        %v1883 = vld [vmem:[#allocation8 + $0x4] sm:$0xf]
        %v1884 = vld [vmem:[#allocation8 + $0x8] sm:$0xf]
        %v1885 = vld [vmem:[#allocation8 + $0xc] sm:$0xf]
        %v1886 = vld [vmem:[#allocation8 + $0x10] sm:$0xf]
        %v1887 = vld [vmem:[#allocation8 + $0x14] sm:$0xf]
        %v1888 = vld [vmem:[#allocation8 + $0x18] sm:$0xf]
        %v1889 = vld [vmem:[#allocation8 + $0x1c] sm:$0xf]
        %v1890 = vld [vmem:[#allocation8 + $0x20] sm:$0xf]
        %v1891 = vld [vmem:[#allocation8 + $0x24] sm:$0xf]
        %v1892 = vld [vmem:[#allocation8 + $0x28] sm:$0xf]
        %v1893 = vld [vmem:[#allocation8 + $0x2c] sm:$0xf]
        %v1894 = vld [vmem:[#allocation8 + $0x30] sm:$0xf]
        %v1895 = vld [vmem:[#allocation8 + $0x34] sm:$0xf]
        %v1896 = vld [vmem:[#allocation8 + $0x38] sm:$0xf]
        %v1897 = vld [vmem:[#allocation8 + $0x3c] sm:$0xf]
        %v1898 = vld [vmem:[#allocation8 + $0x40] sm:$0xf]
        %v1899 = vld [vmem:[#allocation8 + $0x44] sm:$0xf]
        %v1900 = vld [vmem:[#allocation8 + $0x48] sm:$0xf]
        %v1901 = vld [vmem:[#allocation8 + $0x4c] sm:$0xf]
        %v1902 = vld [vmem:[#allocation8 + $0x50] sm:$0xf]
        %v1903 = vld [vmem:[#allocation8 + $0x54] sm:$0xf]
        %v1904 = vld [vmem:[#allocation8 + $0x58] sm:$0xf]
        %v1905 = vld [vmem:[#allocation8 + $0x5c] sm:$0xf]
        %v1906 = vld [vmem:[#allocation8 + $0x60] sm:$0xf]
        %v1907 = vld [vmem:[#allocation8 + $0x64] sm:$0xf]
        %v1908 = vld [vmem:[#allocation8 + $0x68] sm:$0xf]
        %v1909 = vld [vmem:[#allocation8 + $0x6c] sm:$0xf]
        %v1910 = vld [vmem:[#allocation8 + $0x70] sm:$0xf]
        %v1911 = vld [vmem:[#allocation8 + $0x74] sm:$0xf]
        %v1912 = vld [vmem:[#allocation8 + $0x78] sm:$0xf]
        %v1913 = vld [vmem:[#allocation8 + $0x7c] sm:$0xf]
        %v1914 = vld [vmem:[#allocation8 + $0x80] sm:$0xf]
        %v1915 = vld [vmem:[#allocation8 + $0x84] sm:$0xf]
        %v1916 = vld [vmem:[#allocation8 + $0x88] sm:$0xf]
        %v1917 = vld [vmem:[#allocation8 + $0x8c] sm:$0xf]
        %v1918 = vld [vmem:[#allocation8 + $0x90] sm:$0xf]
        %v1919 = vld [vmem:[#allocation8 + $0x94] sm:$0xf]
        %v1920 = vld [vmem:[#allocation8 + $0x98] sm:$0xf]
        %v1921 = vld [vmem:[#allocation8 + $0x9c] sm:$0xf]
        %v1922 = vld [vmem:[#allocation8 + $0xa0] sm:$0xf]
        %v1923 = vld [vmem:[#allocation8 + $0xa4] sm:$0xf]
        %v1924 = vld [vmem:[#allocation8 + $0xa8] sm:$0xf]
        %v1925 = vld [vmem:[#allocation8 + $0xac] sm:$0xf]
        %v1926 = vld [vmem:[#allocation8 + $0xb0] sm:$0xf]
        %v1927 = vld [vmem:[#allocation8 + $0xb4] sm:$0xf]
        %v1928 = vld [vmem:[#allocation8 + $0xb8] sm:$0xf]
        %v1929 = vld [vmem:[#allocation8 + $0xbc] sm:$0xf]
        %v1930 = vld [vmem:[#allocation8 + $0xc0] sm:$0xf]
        %v1931 = vld [vmem:[#allocation8 + $0xc4] sm:$0xf]
        %v1932 = vld [vmem:[#allocation8 + $0xc8] sm:$0xf]
        %v1933 = vld [vmem:[#allocation8 + $0xcc] sm:$0xf]
        %v1934 = vld [vmem:[#allocation8 + $0xd0] sm:$0xf]
        %v1935 = vld [vmem:[#allocation8 + $0xd4] sm:$0xf]
        %v1936 = vld [vmem:[#allocation8 + $0xd8] sm:$0xf]
        %v1937 = vld [vmem:[#allocation8 + $0xdc] sm:$0xf]
        %v1938 = vld [vmem:[#allocation8 + $0xe0] sm:$0xf]
        %v1939 = vld [vmem:[#allocation8 + $0xe4] sm:$0xf]
        %v1940 = vld [vmem:[#allocation8 + $0xe8] sm:$0xf]
        %v1941 = vld [vmem:[#allocation8 + $0xec] sm:$0xf]
        %v1942 = vld [vmem:[#allocation8 + $0xf0] sm:$0xf]
        %v1943 = vld [vmem:[#allocation8 + $0xf4] sm:$0xf]
        %v1944 = vld [vmem:[#allocation8 + $0xf8] sm:$0xf]
        %v1945 = vld [vmem:[#allocation8 + $0xfc] sm:$0xf]
        %v1946 = vld [vmem:[#allocation8 + $0x100] sm:$0xf]
        %v1947 = vld [vmem:[#allocation8 + $0x104] sm:$0xf]
        %v1948 = vld [vmem:[#allocation8 + $0x108] sm:$0xf]
        %v1949 = vld [vmem:[#allocation8 + $0x10c] sm:$0xf]
        %v1950 = vld [vmem:[#allocation8 + $0x110] sm:$0xf]
        %v1951 = vld [vmem:[#allocation8 + $0x114] sm:$0xf]
        %v1952 = vld [vmem:[#allocation8 + $0x118] sm:$0xf]
        %v1953 = vld [vmem:[#allocation8 + $0x11c] sm:$0xf]
        %v1954 = vld [vmem:[#allocation8 + $0x120] sm:$0xf]
        %v1955 = vld [vmem:[#allocation8 + $0x124] sm:$0xf]
        %v1956 = vld [vmem:[#allocation8 + $0x128] sm:$0xf]
        %v1957 = vld [vmem:[#allocation8 + $0x12c] sm:$0xf]
        %v1958 = vld [vmem:[#allocation8 + $0x130] sm:$0xf]
        %v1959 = vld [vmem:[#allocation8 + $0x134] sm:$0xf]
        %v1960 = vld [vmem:[#allocation8 + $0x138] sm:$0xf]
        %v1961 = vld [vmem:[#allocation8 + $0x13c] sm:$0xf]
        %v1962 = vld [vmem:[#allocation8 + $0x140] sm:$0xf]
        %v1963 = vld [vmem:[#allocation8 + $0x144] sm:$0xf]
        %v1964 = vld [vmem:[#allocation8 + $0x148] sm:$0xf]
        %v1965 = vld [vmem:[#allocation8 + $0x14c] sm:$0xf]
        %v1966 = vld [vmem:[#allocation8 + $0x150] sm:$0xf]
        %v1967 = vld [vmem:[#allocation8 + $0x154] sm:$0xf]
        %v1968 = vld [vmem:[#allocation8 + $0x158] sm:$0xf]
        %v1969 = vld [vmem:[#allocation8 + $0x15c] sm:$0xf]
        %v1970 = vld [vmem:[#allocation8 + $0x160] sm:$0xf]
        %v1971 = vld [vmem:[#allocation8 + $0x164] sm:$0xf]
        %v1972 = vld [vmem:[#allocation8 + $0x168] sm:$0xf]
        %v1973 = vld [vmem:[#allocation8 + $0x16c] sm:$0xf]
        %v1974 = vld [vmem:[#allocation8 + $0x170] sm:$0xf]
        %v1975 = vld [vmem:[#allocation8 + $0x174] sm:$0xf]
        %v1976 = vld [vmem:[#allocation8 + $0x178] sm:$0xf]
        %v1977 = vld [vmem:[#allocation8 + $0x17c] sm:$0xf]
        %v1978 = vld [vmem:[#allocation8 + $0x180] sm:$0xf]
        %v1979 = vld [vmem:[#allocation8 + $0x184] sm:$0xf]
        %v1980 = vld [vmem:[#allocation8 + $0x188] sm:$0xf]
        %v1981 = vld [vmem:[#allocation8 + $0x18c] sm:$0xf]
        %v1982 = vld [vmem:[#allocation8 + $0x190] sm:$0xf]
        %v1983 = vld [vmem:[#allocation8 + $0x194] sm:$0xf]
        %v1984 = vld [vmem:[#allocation8 + $0x198] sm:$0xf]
        %v1985 = vld [vmem:[#allocation8 + $0x19c] sm:$0xf]
        %v1986 = vld [vmem:[#allocation8 + $0x1a0] sm:$0xf]
        %v1987 = vld [vmem:[#allocation8 + $0x1a4] sm:$0xf]
        %v1988 = vld [vmem:[#allocation8 + $0x1a8] sm:$0xf]
        %v1989 = vld [vmem:[#allocation8 + $0x1ac] sm:$0xf]
        %v1990 = vld [vmem:[#allocation8 + $0x1b0] sm:$0xf]
        %v1991 = vld [vmem:[#allocation8 + $0x1b4] sm:$0xf]
        %v1992 = vld [vmem:[#allocation8 + $0x1b8] sm:$0xf]
        %v1993 = vld [vmem:[#allocation8 + $0x1bc] sm:$0xf]
        %v1994 = vld [vmem:[#allocation8 + $0x1c0] sm:$0xf]
        %v1995 = vld [vmem:[#allocation8 + $0x1c4] sm:$0xf]
        %v1996 = vld [vmem:[#allocation8 + $0x1c8] sm:$0xf]
        %v1997 = vld [vmem:[#allocation8 + $0x1cc] sm:$0xf]
        %v1998 = vld [vmem:[#allocation8 + $0x1d0] sm:$0xf]
        %v1999 = vld [vmem:[#allocation8 + $0x1d4] sm:$0xf]
        %v2000 = vld [vmem:[#allocation8 + $0x1d8] sm:$0xf]
        %v2001 = vld [vmem:[#allocation8 + $0x1dc] sm:$0xf]
        %v2002 = vld [vmem:[#allocation8 + $0x1e0] sm:$0xf]
        %v2003 = vld [vmem:[#allocation8 + $0x1e4] sm:$0xf]
        %v2004 = vld [vmem:[#allocation8 + $0x1e8] sm:$0xf]
        %v2005 = vld [vmem:[#allocation8 + $0x1ec] sm:$0xf]
        %v2006 = vld [vmem:[#allocation8 + $0x1f0] sm:$0xf]
        %v2007 = vld [vmem:[#allocation8 + $0x1f4] sm:$0xf]
        %v2008 = vld [vmem:[#allocation8 + $0x1f8] sm:$0xf]
        %v2009 = vld [vmem:[#allocation8 + $0x1fc] sm:$0xf]
        %v2010 = vld [vmem:[#allocation8 + $0x200] sm:$0xf]
        %v2011 = vld [vmem:[#allocation8 + $0x204] sm:$0xf]
        %v2012 = vld [vmem:[#allocation8 + $0x208] sm:$0xf]
        %v2013 = vld [vmem:[#allocation8 + $0x20c] sm:$0xf]
        %v2014 = vld [vmem:[#allocation8 + $0x210] sm:$0xf]
        %v2015 = vld [vmem:[#allocation8 + $0x214] sm:$0xf]
        %v2016 = vld [vmem:[#allocation8 + $0x218] sm:$0xf]
        %v2017 = vld [vmem:[#allocation8 + $0x21c] sm:$0xf]
        %v2018 = vld [vmem:[#allocation8 + $0x220] sm:$0xf]
        %v2019 = vld [vmem:[#allocation8 + $0x224] sm:$0xf]
        %v2020 = vld [vmem:[#allocation8 + $0x228] sm:$0xf]
        %v2021 = vld [vmem:[#allocation8 + $0x22c] sm:$0xf]
        %v2022 = vld [vmem:[#allocation8 + $0x230] sm:$0xf]
        %v2023 = vld [vmem:[#allocation8 + $0x234] sm:$0xf]
        %v2024 = vld [vmem:[#allocation8 + $0x238] sm:$0xf]
        %v2025 = vld [vmem:[#allocation8 + $0x23c] sm:$0xf]
        %v2026 = vunpack.c.l.bf16 %v375
        %v2027 = vunpack.c.l.bf16 %v376
        %v2028 = vunpack.c.l.bf16 %v377
        %v2029 = vunpack.c.l.bf16 %v378
        %v2030 = vunpack.c.l.bf16 %v379
        %v2031 = vunpack.c.l.bf16 %v380
        %v2032 = vunpack.c.l.bf16 %v381
        %v2033 = vunpack.c.l.bf16 %v382
        %v2034 = vld [vmem:[%s5] sm:$0x1]
        %v2036 = vlaneseq
        %v2037 = vshrl.u32 %v2036, 7
        %v2038 = vsub.s32 0, %v2037
        %v2039 = vrot.slane %v2034, %v2038
        %v2185 = vunpack.c.l.b16 %v1882
        %v2186 = vunpack.c.l.b16 %v1883
        %v2187 = vunpack.c.l.b16 %v1884
        %v2188 = vunpack.c.l.b16 %v1885
        %v2189 = vunpack.c.l.b16 %v1886
        %v2190 = vunpack.c.l.b16 %v1887
        %v2191 = vunpack.c.l.b16 %v1888
        %v2192 = vunpack.c.l.b16 %v1889
        %v2193 = vunpack.c.l.b16 %v1890
        %v2194 = vunpack.c.l.b16 %v1891
        %v2195 = vunpack.c.l.b16 %v1892
        %v2196 = vunpack.c.l.b16 %v1893
        %v2197 = vunpack.c.l.b16 %v1894
        %v2198 = vunpack.c.l.b16 %v1895
        %v2199 = vunpack.c.l.b16 %v1896
        %v2200 = vunpack.c.l.b16 %v1897
        %v2201 = vunpack.c.l.b16 %v1898
        %v2202 = vunpack.c.l.b16 %v1899
        %v2203 = vunpack.c.l.b16 %v1900
        %v2204 = vunpack.c.l.b16 %v1901
        %v2205 = vunpack.c.l.b16 %v1902
        %v2206 = vunpack.c.l.b16 %v1903
        %v2207 = vunpack.c.l.b16 %v1904
        %v2208 = vunpack.c.l.b16 %v1905
        %v2209 = vunpack.c.l.b16 %v1906
        %v2210 = vunpack.c.l.b16 %v1907
        %v2211 = vunpack.c.l.b16 %v1908
        %v2212 = vunpack.c.l.b16 %v1909
        %v2213 = vunpack.c.l.b16 %v1910
        %v2214 = vunpack.c.l.b16 %v1911
        %v2215 = vunpack.c.l.b16 %v1912
        %v2216 = vunpack.c.l.b16 %v1913
        %v2217 = vunpack.c.l.b16 %v1914
        %v2218 = vunpack.c.l.b16 %v1915
        %v2219 = vunpack.c.l.b16 %v1916
        %v2220 = vunpack.c.l.b16 %v1917
        %v2221 = vunpack.c.l.b16 %v1918
        %v2222 = vunpack.c.l.b16 %v1919
        %v2223 = vunpack.c.l.b16 %v1920
        %v2224 = vunpack.c.l.b16 %v1921
        %v2225 = vunpack.c.l.b16 %v1922
        %v2226 = vunpack.c.l.b16 %v1923
        %v2227 = vunpack.c.l.b16 %v1924
        %v2228 = vunpack.c.l.b16 %v1925
        %v2229 = vunpack.c.l.b16 %v1926
        %v2230 = vunpack.c.l.b16 %v1927
        %v2231 = vunpack.c.l.b16 %v1928
        %v2232 = vunpack.c.l.b16 %v1929
        %v2233 = vunpack.c.l.b16 %v1930
        %v2234 = vunpack.c.l.b16 %v1931
        %v2235 = vunpack.c.l.b16 %v1932
        %v2236 = vunpack.c.l.b16 %v1933
        %v2237 = vunpack.c.l.b16 %v1934
        %v2238 = vunpack.c.l.b16 %v1935
        %v2239 = vunpack.c.l.b16 %v1936
        %v2240 = vunpack.c.l.b16 %v1937
        %v2241 = vunpack.c.l.b16 %v1938
        %v2242 = vunpack.c.l.b16 %v1939
        %v2243 = vunpack.c.l.b16 %v1940
        %v2244 = vunpack.c.l.b16 %v1941
        %v2245 = vunpack.c.l.b16 %v1942
        %v2246 = vunpack.c.l.b16 %v1943
        %v2247 = vunpack.c.l.b16 %v1944
        %v2248 = vunpack.c.l.b16 %v1945
        %v2249 = vunpack.c.l.b16 %v1946
        %v2250 = vunpack.c.l.b16 %v1947
        %v2251 = vunpack.c.l.b16 %v1948
        %v2252 = vunpack.c.l.b16 %v1949
        %v2253 = vunpack.c.l.b16 %v1950
        %v2254 = vunpack.c.l.b16 %v1951
        %v2255 = vunpack.c.l.b16 %v1952
        %v2256 = vunpack.c.l.b16 %v1953
        %v2257 = vunpack.c.l.b16 %v1954
        %v2258 = vunpack.c.l.b16 %v1955
        %v2259 = vunpack.c.l.b16 %v1956
        %v2260 = vunpack.c.l.b16 %v1957
        %v2261 = vunpack.c.l.b16 %v1958
        %v2262 = vunpack.c.l.b16 %v1959
        %v2263 = vunpack.c.l.b16 %v1960
        %v2264 = vunpack.c.l.b16 %v1961
        %v2265 = vunpack.c.l.b16 %v1962
        %v2266 = vunpack.c.l.b16 %v1963
        %v2267 = vunpack.c.l.b16 %v1964
        %v2268 = vunpack.c.l.b16 %v1965
        %v2269 = vunpack.c.l.b16 %v1966
        %v2270 = vunpack.c.l.b16 %v1967
        %v2271 = vunpack.c.l.b16 %v1968
        %v2272 = vunpack.c.l.b16 %v1969
        %v2273 = vunpack.c.l.b16 %v1970
        %v2274 = vunpack.c.l.b16 %v1971
        %v2275 = vunpack.c.l.b16 %v1972
        %v2276 = vunpack.c.l.b16 %v1973
        %v2277 = vunpack.c.l.b16 %v1974
        %v2278 = vunpack.c.l.b16 %v1975
        %v2279 = vunpack.c.l.b16 %v1976
        %v2280 = vunpack.c.l.b16 %v1977
        %v2281 = vunpack.c.l.b16 %v1978
        %v2282 = vunpack.c.l.b16 %v1979
        %v2283 = vunpack.c.l.b16 %v1980
        %v2284 = vunpack.c.l.b16 %v1981
        %v2285 = vunpack.c.l.b16 %v1982
        %v2286 = vunpack.c.l.b16 %v1983
        %v2287 = vunpack.c.l.b16 %v1984
        %v2288 = vunpack.c.l.b16 %v1985
        %v2289 = vunpack.c.l.b16 %v1986
        %v2290 = vunpack.c.l.b16 %v1987
        %v2291 = vunpack.c.l.b16 %v1988
        %v2292 = vunpack.c.l.b16 %v1989
        %v2293 = vunpack.c.l.b16 %v1990
        %v2294 = vunpack.c.l.b16 %v1991
        %v2295 = vunpack.c.l.b16 %v1992
        %v2296 = vunpack.c.l.b16 %v1993
        %v2297 = vunpack.c.l.b16 %v1994
        %v2298 = vunpack.c.l.b16 %v1995
        %v2299 = vunpack.c.l.b16 %v1996
        %v2300 = vunpack.c.l.b16 %v1997
        %v2301 = vunpack.c.l.b16 %v1998
        %v2302 = vunpack.c.l.b16 %v1999
        %v2303 = vunpack.c.l.b16 %v2000
        %v2304 = vunpack.c.l.b16 %v2001
        %v2305 = vunpack.c.l.b16 %v2002
        %v2306 = vunpack.c.l.b16 %v2003
        %v2307 = vunpack.c.l.b16 %v2004
        %v2308 = vunpack.c.l.b16 %v2005
        %v2309 = vunpack.c.l.b16 %v2006
        %v2310 = vunpack.c.l.b16 %v2007
        %v2311 = vunpack.c.l.b16 %v2008
        %v2312 = vunpack.c.l.b16 %v2009
        %v2313 = vunpack.c.l.b16 %v2010
        %v2314 = vunpack.c.l.b16 %v2011
        %v2315 = vunpack.c.l.b16 %v2012
        %v2316 = vunpack.c.l.b16 %v2013
        %v2317 = vunpack.c.l.b16 %v2014
        %v2318 = vunpack.c.l.b16 %v2015
        %v2319 = vunpack.c.l.b16 %v2016
        %v2320 = vunpack.c.l.b16 %v2017
        %v2321 = vunpack.c.l.b16 %v2018
        %v2322 = vunpack.c.l.b16 %v2019
        %v2323 = vunpack.c.l.b16 %v2020
        %v2324 = vunpack.c.l.b16 %v2021
        %v2325 = vunpack.c.l.b16 %v2022
        %v2326 = vunpack.c.l.b16 %v2023
        %v2327 = vunpack.c.l.b16 %v2024
        %v2328 = vunpack.c.l.b16 %v2025
        %v2329 = vpack.c.b16 %v2186, %v2185
        %v2330 = vpack.c.b16 %v2188, %v2187
        %v2331 = vpack.c.b16 %v2190, %v2189
        %v2332 = vpack.c.b16 %v2192, %v2191
        %v2333 = vpack.c.b16 %v2194, %v2193
        %v2334 = vpack.c.b16 %v2196, %v2195
        %v2335 = vpack.c.b16 %v2198, %v2197
        %v2336 = vpack.c.b16 %v2200, %v2199
        %v2337 = vpack.c.b16 %v2202, %v2201
        %v2338 = vpack.c.b16 %v2204, %v2203
        %v2339 = vpack.c.b16 %v2206, %v2205
        %v2340 = vpack.c.b16 %v2208, %v2207
        %v2341 = vpack.c.b16 %v2210, %v2209
        %v2342 = vpack.c.b16 %v2212, %v2211
        %v2343 = vpack.c.b16 %v2214, %v2213
        %v2344 = vpack.c.b16 %v2216, %v2215
        %v2345 = vpack.c.b16 %v2218, %v2217
        %v2346 = vpack.c.b16 %v2220, %v2219
        %v2347 = vpack.c.b16 %v2222, %v2221
        %v2348 = vpack.c.b16 %v2224, %v2223
        %v2349 = vpack.c.b16 %v2226, %v2225
        %v2350 = vpack.c.b16 %v2228, %v2227
        %v2351 = vpack.c.b16 %v2230, %v2229
        %v2352 = vpack.c.b16 %v2232, %v2231
        %v2353 = vpack.c.b16 %v2234, %v2233
        %v2354 = vpack.c.b16 %v2236, %v2235
        %v2355 = vpack.c.b16 %v2238, %v2237
        %v2356 = vpack.c.b16 %v2240, %v2239
        %v2357 = vpack.c.b16 %v2242, %v2241
        %v2358 = vpack.c.b16 %v2244, %v2243
        %v2359 = vpack.c.b16 %v2246, %v2245
        %v2360 = vpack.c.b16 %v2248, %v2247
        %v2361 = vpack.c.b16 %v2250, %v2249
        %v2362 = vpack.c.b16 %v2252, %v2251
        %v2363 = vpack.c.b16 %v2254, %v2253
        %v2364 = vpack.c.b16 %v2256, %v2255
        %v2365 = vpack.c.b16 %v2258, %v2257
        %v2366 = vpack.c.b16 %v2260, %v2259
        %v2367 = vpack.c.b16 %v2262, %v2261
        %v2368 = vpack.c.b16 %v2264, %v2263
        %v2369 = vpack.c.b16 %v2266, %v2265
        %v2370 = vpack.c.b16 %v2268, %v2267
        %v2371 = vpack.c.b16 %v2270, %v2269
        %v2372 = vpack.c.b16 %v2272, %v2271
        %v2373 = vpack.c.b16 %v2274, %v2273
        %v2374 = vpack.c.b16 %v2276, %v2275
        %v2375 = vpack.c.b16 %v2278, %v2277
        %v2376 = vpack.c.b16 %v2280, %v2279
        %v2377 = vpack.c.b16 %v2282, %v2281
        %v2378 = vpack.c.b16 %v2284, %v2283
        %v2379 = vpack.c.b16 %v2286, %v2285
        %v2380 = vpack.c.b16 %v2288, %v2287
        %v2381 = vpack.c.b16 %v2290, %v2289
        %v2382 = vpack.c.b16 %v2292, %v2291
        %v2383 = vpack.c.b16 %v2294, %v2293
        %v2384 = vpack.c.b16 %v2296, %v2295
        %v2385 = vpack.c.b16 %v2298, %v2297
        %v2386 = vpack.c.b16 %v2300, %v2299
        %v2387 = vpack.c.b16 %v2302, %v2301
        %v2388 = vpack.c.b16 %v2304, %v2303
        %v2389 = vpack.c.b16 %v2306, %v2305
        %v2390 = vpack.c.b16 %v2308, %v2307
        %v2391 = vpack.c.b16 %v2310, %v2309
        %v2392 = vpack.c.b16 %v2312, %v2311
        %v2393 = vpack.c.b16 %v2314, %v2313
        %v2394 = vpack.c.b16 %v2316, %v2315
        %v2395 = vpack.c.b16 %v2318, %v2317
        %v2396 = vpack.c.b16 %v2320, %v2319
        %v2397 = vpack.c.b16 %v2322, %v2321
        %v2398 = vpack.c.b16 %v2324, %v2323
        %v2399 = vpack.c.b16 %v2326, %v2325
        %v2400 = vpack.c.b16 %v2328, %v2327
        %2473 = vmatprep.subr.bf16.mxu0 0
        %2474 = vmatpush1.bf16.msra.mxu0 %v2336
        %2475 = vmatprep.subr.bf16.mxu0 0
        %2476 = vmatpush1.bf16.msra.mxu0 %v2335
        %2477 = vmatprep.subr.bf16.mxu0 0
        %2478 = vmatpush1.bf16.msra.mxu0 %v2334
        %2479 = vmatprep.subr.bf16.mxu0 0
        %2480 = vmatpush1.bf16.msra.mxu0 %v2333
        %2481 = vmatprep.subr.bf16.mxu0 0
        %2482 = vmatpush1.bf16.msra.mxu0 %v2332
        %2483 = vmatprep.subr.bf16.mxu0 0
        %2484 = vmatpush1.bf16.msra.mxu0 %v2331
        %2485 = vmatprep.subr.bf16.mxu0 0
        %2486 = vmatpush1.bf16.msra.mxu0 %v2330
        %2487 = vmatprep.subr.bf16.mxu0 0
        %2488 = vmatpush1.bf16.msra.mxu0 %v2329
        %2489 = vmatprep.subr.bf16.mxu0 0
        %2490 = vmatpush2.bf16.msra.mxu0 %v2344
        %2491 = vmatprep.subr.bf16.mxu0 0
        %2492 = vmatpush2.bf16.msra.mxu0 %v2343
        %2493 = vmatprep.subr.bf16.mxu0 0
        %2494 = vmatpush2.bf16.msra.mxu0 %v2342
        %2495 = vmatprep.subr.bf16.mxu0 0
        %2496 = vmatpush2.bf16.msra.mxu0 %v2341
        %2497 = vmatprep.subr.bf16.mxu0 0
        %2498 = vmatpush2.bf16.msra.mxu0 %v2340
        %2499 = vmatprep.subr.bf16.mxu0 0
        %2500 = vmatpush2.bf16.msra.mxu0 %v2339
        %2501 = vmatprep.subr.bf16.mxu0 0
        %2502 = vmatpush2.bf16.msra.mxu0 %v2338
        %2503 = vmatprep.subr.bf16.mxu0 0
        %2504 = vmatpush2.bf16.msra.mxu0 %v2337
        %2505 = vmatprep.mubr.bf16.mxu0 %v1779
        %2506 = vmatmul.mubr.bf16.gmra.mxu0 %v1756
        %v2507 = vpop.f32.mrf.mxu0
        %v2508 = vadd.f32 %v2039, %v2507
        %v2509 = vpop.f32.mrf.mxu0
        %v2510 = vpop.f32.mrf.mxu0
        %v2511 = vadd.f32 %v2039, %v2510
        %v2512 = vpop.f32.mrf.mxu0
        %2513 = vmatprep.mubr.bf16.mxu0 %v1791
        %2514 = vmatmul.mubr.bf16.gmra.mxu0 %v1757
        %v2515 = vpop.f32.mrf.mxu0
        %v2516 = vadd.f32 %v2039, %v2515
        %v2517 = vpop.f32.mrf.mxu0
        %v2518 = vpop.f32.mrf.mxu0
        %v2519 = vadd.f32 %v2039, %v2518
        %v2520 = vpop.f32.mrf.mxu0
        %2521 = vmatprep.mubr.bf16.mxu0 %v1803
        %2522 = vmatmul.mubr.bf16.gmra.mxu0 %v1758
        %v2523 = vpop.f32.mrf.mxu0
        %v2524 = vadd.f32 %v2039, %v2523
        %v2525 = vpop.f32.mrf.mxu0
        %v2526 = vpop.f32.mrf.mxu0
        %v2527 = vadd.f32 %v2039, %v2526
        %v2528 = vpop.f32.mrf.mxu0
        %2529 = vmatprep.mubr.bf16.mxu0 %v1815
        %2530 = vmatmul.mubr.bf16.gmra.mxu0 %v1759
        %v2531 = vpop.f32.mrf.mxu0
        %v2532 = vadd.f32 %v2039, %v2531
        %v2533 = vpop.f32.mrf.mxu0
        %v2534 = vpop.f32.mrf.mxu0
        %v2535 = vadd.f32 %v2039, %v2534
        %v2536 = vpop.f32.mrf.mxu0
        %2537 = vdwg.mxu0
        %2538 = vmatprep.subr.bf16.mxu0 0
        %2539 = vmatpush1.bf16.msra.mxu0 %v2352
        %2540 = vmatprep.subr.bf16.mxu0 0
        %2541 = vmatpush1.bf16.msra.mxu0 %v2351
        %2542 = vmatprep.subr.bf16.mxu0 0
        %2543 = vmatpush1.bf16.msra.mxu0 %v2350
        %2544 = vmatprep.subr.bf16.mxu0 0
        %2545 = vmatpush1.bf16.msra.mxu0 %v2349
        %2546 = vmatprep.subr.bf16.mxu0 0
        %2547 = vmatpush1.bf16.msra.mxu0 %v2348
        %2548 = vmatprep.subr.bf16.mxu0 0
        %2549 = vmatpush1.bf16.msra.mxu0 %v2347
        %2550 = vmatprep.subr.bf16.mxu0 0
        %2551 = vmatpush1.bf16.msra.mxu0 %v2346
        %2552 = vmatprep.subr.bf16.mxu0 0
        %2553 = vmatpush1.bf16.msra.mxu0 %v2345
        %2554 = vmatprep.subr.bf16.mxu0 0
        %2555 = vmatpush2.bf16.msra.mxu0 %v2360
        %2556 = vmatprep.subr.bf16.mxu0 0
        %2557 = vmatpush2.bf16.msra.mxu0 %v2359
        %2558 = vmatprep.subr.bf16.mxu0 0
        %2559 = vmatpush2.bf16.msra.mxu0 %v2358
        %2560 = vmatprep.subr.bf16.mxu0 0
        %2561 = vmatpush2.bf16.msra.mxu0 %v2357
        %2562 = vmatprep.subr.bf16.mxu0 0
        %2563 = vmatpush2.bf16.msra.mxu0 %v2356
        %2564 = vmatprep.subr.bf16.mxu0 0
        %2565 = vmatpush2.bf16.msra.mxu0 %v2355
        %2566 = vmatprep.subr.bf16.mxu0 0
        %2567 = vmatpush2.bf16.msra.mxu0 %v2354
        %2568 = vmatprep.subr.bf16.mxu0 0
        %2569 = vmatpush2.bf16.msra.mxu0 %v2353
        %2570 = vmatprep.mubr.bf16.mxu0 %v1757
        %2571 = vmatmul.mubr.bf16.gmra.mxu0 %v1830
        %v2572 = vpop.f32.mrf.mxu0
        %v2573 = vadd.f32 %v2508, %v2572
        %v2574 = vpop.f32.mrf.mxu0
        %v2575 = vpop.f32.mrf.mxu0
        %v2576 = vadd.f32 %v2511, %v2575
        %v2577 = vpop.f32.mrf.mxu0
        %2578 = vmatprep.mubr.bf16.mxu0 %v1758
        %2579 = vmatmul.mubr.bf16.gmra.mxu0 %v1833
        %v2580 = vpop.f32.mrf.mxu0
        %v2581 = vadd.f32 %v2516, %v2580
        %v2582 = vpop.f32.mrf.mxu0
        %v2583 = vpop.f32.mrf.mxu0
        %v2584 = vadd.f32 %v2519, %v2583
        %v2585 = vpop.f32.mrf.mxu0
        %2586 = vmatprep.mubr.bf16.mxu0 %v1759
        %2587 = vmatmul.mubr.bf16.gmra.mxu0 %v1836
        %v2588 = vpop.f32.mrf.mxu0
        %v2589 = vadd.f32 %v2524, %v2588
        %v2590 = vpop.f32.mrf.mxu0
        %v2591 = vpop.f32.mrf.mxu0
        %v2592 = vadd.f32 %v2527, %v2591
        %v2593 = vpop.f32.mrf.mxu0
        %2594 = vmatprep.mubr.bf16.mxu0 %v1760
        %2595 = vmatmul.mubr.bf16.gmra.mxu0 %v1839
        %v2596 = vpop.f32.mrf.mxu0
        %v2597 = vadd.f32 %v2532, %v2596
        %v2598 = vpop.f32.mrf.mxu0
        %v2599 = vpop.f32.mrf.mxu0
        %v2600 = vadd.f32 %v2535, %v2599
        %v2601 = vpop.f32.mrf.mxu0
        %2602 = vdwg.mxu0
        %2603 = vmatprep.subr.bf16.mxu0 0
        %2604 = vmatpush1.bf16.msra.mxu0 %v2368
        %2605 = vmatprep.subr.bf16.mxu0 0
        %2606 = vmatpush1.bf16.msra.mxu0 %v2367
        %2607 = vmatprep.subr.bf16.mxu0 0
        %2608 = vmatpush1.bf16.msra.mxu0 %v2366
        %2609 = vmatprep.subr.bf16.mxu0 0
        %2610 = vmatpush1.bf16.msra.mxu0 %v2365
        %2611 = vmatprep.subr.bf16.mxu0 0
        %2612 = vmatpush1.bf16.msra.mxu0 %v2364
        %2613 = vmatprep.subr.bf16.mxu0 0
        %2614 = vmatpush1.bf16.msra.mxu0 %v2363
        %2615 = vmatprep.subr.bf16.mxu0 0
        %2616 = vmatpush1.bf16.msra.mxu0 %v2362
        %2617 = vmatprep.subr.bf16.mxu0 0
        %2618 = vmatpush1.bf16.msra.mxu0 %v2361
        %2619 = vmatprep.subr.bf16.mxu0 0
        %2620 = vmatpush2.bf16.msra.mxu0 %v2376
        %2621 = vmatprep.subr.bf16.mxu0 0
        %2622 = vmatpush2.bf16.msra.mxu0 %v2375
        %2623 = vmatprep.subr.bf16.mxu0 0
        %2624 = vmatpush2.bf16.msra.mxu0 %v2374
        %2625 = vmatprep.subr.bf16.mxu0 0
        %2626 = vmatpush2.bf16.msra.mxu0 %v2373
        %2627 = vmatprep.subr.bf16.mxu0 0
        %2628 = vmatpush2.bf16.msra.mxu0 %v2372
        %2629 = vmatprep.subr.bf16.mxu0 0
        %2630 = vmatpush2.bf16.msra.mxu0 %v2371
        %2631 = vmatprep.subr.bf16.mxu0 0
        %2632 = vmatpush2.bf16.msra.mxu0 %v2370
        %2633 = vmatprep.subr.bf16.mxu0 0
        %2634 = vmatpush2.bf16.msra.mxu0 %v2369
        %2635 = vmatprep.mubr.bf16.mxu0 %v1833
        %2636 = vmatmul.mubr.bf16.gmra.mxu0 %v1791
        %v2637 = vpop.f32.mrf.mxu0
        %v2638 = vadd.f32 %v2573, %v2637
        %v2639 = vpop.f32.mrf.mxu0
        %v2640 = vpop.f32.mrf.mxu0
        %v2641 = vadd.f32 %v2576, %v2640
        %v2642 = vpop.f32.mrf.mxu0
        %2643 = vmatprep.mubr.bf16.mxu0 %v1836
        %2644 = vmatmul.mubr.bf16.gmra.mxu0 %v1803
        %v2645 = vpop.f32.mrf.mxu0
        %v2646 = vadd.f32 %v2581, %v2645
        %v2647 = vpop.f32.mrf.mxu0
        %v2648 = vpop.f32.mrf.mxu0
        %v2649 = vadd.f32 %v2584, %v2648
        %v2650 = vpop.f32.mrf.mxu0
        %2651 = vmatprep.mubr.bf16.mxu0 %v1839
        %2652 = vmatmul.mubr.bf16.gmra.mxu0 %v1815
        %v2653 = vpop.f32.mrf.mxu0
        %v2654 = vadd.f32 %v2589, %v2653
        %v2655 = vpop.f32.mrf.mxu0
        %v2656 = vpop.f32.mrf.mxu0
        %v2657 = vadd.f32 %v2592, %v2656
        %v2658 = vpop.f32.mrf.mxu0
        %2659 = vmatprep.mubr.bf16.mxu0 %v1861
        %2660 = vmatmul.mubr.bf16.gmra.mxu0 %v1855
        %v2661 = vpop.f32.mrf.mxu0
        %v2662 = vadd.f32 %v2597, %v2661
        %v2663 = vpop.f32.mrf.mxu0
        %v2664 = vpop.f32.mrf.mxu0
        %v2665 = vadd.f32 %v2600, %v2664
        %v2666 = vpop.f32.mrf.mxu0
        %2667 = vdwg.mxu0
        %2668 = vmatprep.subr.bf16.mxu0 0
        %2669 = vmatpush1.bf16.msra.mxu0 %v2384
        %2670 = vmatprep.subr.bf16.mxu0 0
        %2671 = vmatpush1.bf16.msra.mxu0 %v2383
        %2672 = vmatprep.subr.bf16.mxu0 0
        %2673 = vmatpush1.bf16.msra.mxu0 %v2382
        %2674 = vmatprep.subr.bf16.mxu0 0
        %2675 = vmatpush1.bf16.msra.mxu0 %v2381
        %2676 = vmatprep.subr.bf16.mxu0 0
        %2677 = vmatpush1.bf16.msra.mxu0 %v2380
        %2678 = vmatprep.subr.bf16.mxu0 0
        %2679 = vmatpush1.bf16.msra.mxu0 %v2379
        %2680 = vmatprep.subr.bf16.mxu0 0
        %2681 = vmatpush1.bf16.msra.mxu0 %v2378
        %2682 = vmatprep.subr.bf16.mxu0 0
        %2683 = vmatpush1.bf16.msra.mxu0 %v2377
        %2684 = vmatprep.subr.bf16.mxu0 0
        %2685 = vmatpush2.bf16.msra.mxu0 %v2392
        %2686 = vmatprep.subr.bf16.mxu0 0
        %2687 = vmatpush2.bf16.msra.mxu0 %v2391
        %2688 = vmatprep.subr.bf16.mxu0 0
        %2689 = vmatpush2.bf16.msra.mxu0 %v2390
        %2690 = vmatprep.subr.bf16.mxu0 0
        %2691 = vmatpush2.bf16.msra.mxu0 %v2389
        %2692 = vmatprep.subr.bf16.mxu0 0
        %2693 = vmatpush2.bf16.msra.mxu0 %v2388
        %2694 = vmatprep.subr.bf16.mxu0 0
        %2695 = vmatpush2.bf16.msra.mxu0 %v2387
        %2696 = vmatprep.subr.bf16.mxu0 0
        %2697 = vmatpush2.bf16.msra.mxu0 %v2386
        %2698 = vmatprep.subr.bf16.mxu0 0
        %2699 = vmatpush2.bf16.msra.mxu0 %v2385
        %2700 = vmatprep.mubr.bf16.mxu0 %v1803
        %2701 = vmatmul.mubr.bf16.gmra.mxu0 %v1758
        %v2702 = vpop.f32.mrf.mxu0
        %v2703 = vadd.f32 %v2638, %v2702
        %v2704 = vpop.f32.mrf.mxu0
        %v2705 = vpop.f32.mrf.mxu0
        %v2706 = vadd.f32 %v2641, %v2705
        %v2707 = vpop.f32.mrf.mxu0
        %2708 = vmatprep.mubr.bf16.mxu0 %v1815
        %2709 = vmatmul.mubr.bf16.gmra.mxu0 %v1759
        %v2710 = vpop.f32.mrf.mxu0
        %v2711 = vadd.f32 %v2646, %v2710
        %v2712 = vpop.f32.mrf.mxu0
        %v2713 = vpop.f32.mrf.mxu0
        %v2714 = vadd.f32 %v2649, %v2713
        %v2715 = vpop.f32.mrf.mxu0
        %2716 = vmatprep.mubr.bf16.mxu0 %v1855
        %2717 = vmatmul.mubr.bf16.gmra.mxu0 %v1760
        %v2718 = vpop.f32.mrf.mxu0
        %v2719 = vadd.f32 %v2654, %v2718
        %v2720 = vpop.f32.mrf.mxu0
        %v2721 = vpop.f32.mrf.mxu0
        %v2722 = vadd.f32 %v2657, %v2721
        %v2723 = vpop.f32.mrf.mxu0
        %2724 = vmatprep.mubr.bf16.mxu0 %v1874
        %2725 = vmatmul.mubr.bf16.gmra.mxu0 %v1761
        %v2726 = vpop.f32.mrf.mxu0
        %v2727 = vadd.f32 %v2662, %v2726
        %v2728 = vpop.f32.mrf.mxu0
        %v2729 = vpop.f32.mrf.mxu0
        %v2730 = vadd.f32 %v2665, %v2729
        %v2731 = vpop.f32.mrf.mxu0
        %2732 = vdwg.mxu0
        %2733 = vmatprep.subr.bf16.mxu0 0
        %2734 = vmatpush1.bf16.msra.mxu0 %v2400
        %2735 = vmatprep.subr.bf16.mxu0 0
        %2736 = vmatpush1.bf16.msra.mxu0 %v2399
        %2737 = vmatprep.subr.bf16.mxu0 0
        %2738 = vmatpush1.bf16.msra.mxu0 %v2398
        %2739 = vmatprep.subr.bf16.mxu0 0
        %2740 = vmatpush1.bf16.msra.mxu0 %v2397
        %2741 = vmatprep.subr.bf16.mxu0 0
        %2742 = vmatpush1.bf16.msra.mxu0 %v2396
        %2743 = vmatprep.subr.bf16.mxu0 0
        %2744 = vmatpush1.bf16.msra.mxu0 %v2395
        %2745 = vmatprep.subr.bf16.mxu0 0
        %2746 = vmatpush1.bf16.msra.mxu0 %v2394
        %2747 = vmatprep.subr.bf16.mxu0 0
        %2748 = vmatpush1.bf16.msra.mxu0 %v2393
        %2749 = vmatprep.subr.bf16.mxu0 0
        %2750 = vmatpush2.bf16.msra.mxu0 0
        %2751 = vmatprep.subr.bf16.mxu0 0
        %2752 = vmatpush2.bf16.msra.mxu0 0
        %2753 = vmatprep.subr.bf16.mxu0 0
        %2754 = vmatpush2.bf16.msra.mxu0 0
        %2755 = vmatprep.subr.bf16.mxu0 0
        %2756 = vmatpush2.bf16.msra.mxu0 0
        %2757 = vmatprep.subr.bf16.mxu0 0
        %2758 = vmatpush2.bf16.msra.mxu0 0
        %2759 = vmatprep.subr.bf16.mxu0 0
        %2760 = vmatpush2.bf16.msra.mxu0 0
        %2761 = vmatprep.subr.bf16.mxu0 0
        %2762 = vmatpush2.bf16.msra.mxu0 0
        %2763 = vmatprep.subr.bf16.mxu0 0
        %2764 = vmatpush2.bf16.msra.mxu0 0
        %2765 = vmatprep.mubr.bf16.mxu0 0
        %2766 = vmatmul.mubr.bf16.gmra.mxu0 %v1836
        %v2767 = vpop.f32.mrf.mxu0
        %v2768 = vadd.f32 %v2703, %v2767
        %v2769 = vpop.f32.mrf.mxu0
        %v2770 = vpop.f32.mrf.mxu0
        %v2771 = vadd.f32 %v2706, %v2770
        %v2772 = vpop.f32.mrf.mxu0
        %2773 = vmatprep.mubr.bf16.mxu0 0
        %2774 = vmatmul.mubr.bf16.gmra.mxu0 %v1839
        %v2775 = vpop.f32.mrf.mxu0
        %v2776 = vadd.f32 %v2711, %v2775
        %v2777 = vpop.f32.mrf.mxu0
        %v2778 = vpop.f32.mrf.mxu0
        %v2779 = vadd.f32 %v2714, %v2778
        %v2780 = vpop.f32.mrf.mxu0
        %2781 = vmatprep.mubr.bf16.mxu0 0
        %2782 = vmatmul.mubr.bf16.gmra.mxu0 %v1861
        %v2783 = vpop.f32.mrf.mxu0
        %v2784 = vadd.f32 %v2719, %v2783
        %v2785 = vpop.f32.mrf.mxu0
        %v2786 = vpop.f32.mrf.mxu0
        %v2787 = vadd.f32 %v2722, %v2786
        %v2788 = vpop.f32.mrf.mxu0
        %2789 = vmatprep.mubr.bf16.mxu0 0
        %2790 = vmatmul.mubr.bf16.gmra.mxu0 %v1880
        %v2791 = vpop.f32.mrf.mxu0
        %v2792 = vadd.f32 %v2727, %v2791
        %v2793 = vpop.f32.mrf.mxu0
        %v2794 = vpop.f32.mrf.mxu0
        %v2795 = vadd.f32 %v2730, %v2794
        %v2796 = vpop.f32.mrf.mxu0
        %2797 = vdwg.mxu0
        %v2798 = vadd.f32 %v2768, %v2026
        %v2799 = vadd.f32 %v2771, %v2027
        %v2800 = vadd.f32 %v2776, %v2028
        %v2801 = vadd.f32 %v2779, %v2029
        %v2802 = vadd.f32 %v2784, %v2030
        %v2803 = vadd.f32 %v2787, %v2031
        %v2804 = vadd.f32 %v2792, %v2032
        %v2805 = vadd.f32 %v2795, %v2033
        %v2806 = vmax.f32 %v2798, 0.0
        %v2807 = vmax.f32 %v2799, 0.0
        %v2808 = vmax.f32 %v2800, 0.0
        %v2809 = vmax.f32 %v2801, 0.0
        %v2810 = vmax.f32 %v2802, 0.0
        %v2811 = vmax.f32 %v2803, 0.0
        %v2812 = vmax.f32 %v2804, 0.0
        %v2813 = vmax.f32 %v2805, 0.0
        %2814 = vst [vmem:[%s365] sm:$0xff] %v2806
        %2815 = vst [vmem:[%s365 + $0x8] sm:$0xff] %v2807
        %2816 = vst [vmem:[%s365 + $0x10] sm:$0xff] %v2808
        %2817 = vst [vmem:[%s365 + $0x18] sm:$0xff] %v2809
        %2818 = vst [vmem:[%s365 + $0x20] sm:$0xff] %v2810
        %2819 = vst [vmem:[%s365 + $0x28] sm:$0xff] %v2811
        %2820 = vst [vmem:[%s365 + $0x30] sm:$0xff] %v2812
        %2821 = vst [vmem:[%s365 + $0x38] sm:$0xff] %v2813
        %s2822 = sand.u32 %s191, 1
        %s2823 = scalar_lea.sflag [#allocation4], %s2822
        %s2824 = sand.u32 %s191, 1
        %s2825 = smul.addr %s2824, 64
        %s2826 = scalar_lea.vmem [#allocation10], %s2825
        // Predicated region
        $region61: #{tpu_custom_call.1} parent=43 // pred_check
          %p2827 = pneg %p201
        $region62: #{tpu_custom_call.1} parent=43 // pred_check_branch
          %2829 = sbr.rel (%p2827) target = $region64
        $region63: #{tpu_custom_call.1} parent=43 // pred_region
          %s2830 = smul.u32 4, %s32
          %s2832 = ssub.s32 1024, 1024
          %2833 = vsyncadd %s2823, %s2832
          %s2834 = smul.addr %s2830, 2
          %s2835 = smul.addr %s31, 32
          %s2836 = sadd.s32 %s2834, %s2835
          %s2837 = smul.addr %s2836, 128
          %s2838 = scalar_lea.hbm %s6, %s2837
          %s2839 = sshll.u32 %s2826, 4
          %s2840 = int_to_ptr.vmem [resolvable:$true] %s2839
          %2845 = dma.vmem_to_hbm [thread:$0]  %s2840, 1024, %s2838, %s2823, 128, 128, 8
        $region64: #{tpu_custom_call.1} parent=43 // pred_fallthru
          _
      $region44: #{tpu_custom_call.1} parent=5 // pred_fallthru
        _
      %p2846 = scmp.le.s32.totalorder 2, %s22
      // Predicated region
      $region65: #{tpu_custom_call.1} parent=5 // pred_check
        %p2847 = pneg %p2846
      $region66: #{tpu_custom_call.1} parent=5 // pred_check_branch
        %2849 = sbr.rel (%p2847) target = $region68
      $region67: #{tpu_custom_call.1} parent=5 // pred_region
        %s2850 = ssub.s32 %s22, 2
        // Predicated region
        $region69: #{tpu_custom_call.1} parent=67 // pred_check
          %p2851 = pneg %p207
        $region70: #{tpu_custom_call.1} parent=67 // pred_check_branch
          %2853 = sbr.rel (%p2851) target = $region72
        $region71: #{tpu_custom_call.1} parent=67 // pred_region
          %s2854 = sand.u32 %s192, 1
          %s2855 = scalar_lea.sflag [#allocation4], %s2854
          %s2856 = sand.u32 %s192, 1
          %s2857 = smul.addr %s2856, 64
          %s2858 = scalar_lea.vmem [#allocation10], %s2857
          %2859 = dma.done %s2855, 1024
        $region72: #{tpu_custom_call.1} parent=67 // pred_fallthru
          _
      $region68: #{tpu_custom_call.1} parent=5 // pred_fallthru
        _
    $region6: #{tpu_custom_call.1} parent=1 // loop_footer
      %s26 = sadd.s32 1, %s22
    $region7: #{tpu_custom_call.1} parent=1 // loop_footer_branch
      %21 = sbr.rel target = $region3
    $region8: #{tpu_custom_call.1} parent=1 // loop_exit
      _
    %2860 = vsyncpa [#allocation3], 1
    %s2861 = scalar_lea.sflag [#allocation3], 1
    %2862 = vsyncpa %s2861, 1
    %2863 = vsyncpa [#allocation6], 1
    %s2864 = scalar_lea.sflag [#allocation6], 1
    %2865 = vsyncpa %s2864, 1
    %2866 = vsyncpa [#allocation9], 1
    %2867 = vsyncpa [#allocation4], 1
    %s2868 = scalar_lea.sflag [#allocation4], 1
    %2869 = vsyncpa %s2868, 1

</llo_original>
